<compile_context>
chip_gen: v7x
topology: tpu7x:2x2x1
jax: 0.10.0
libtpu: 0.0.40
codegen_flags: <defaults>
</compile_context>

<pallas_src>
import functools

import jax
import jax.numpy as jnp
from jax import lax
from jax.experimental import pallas as pl
from jax.experimental.pallas import tpu as pltpu

LANE = 128
MIN_BATCH_TILE = 16  # bf16 packs 2 rows per sublane -> tile rows multiple of 16


def _round_up(n, m):
    return ((n + m - 1) // m) * m


def _cdiv(a, b):
    return -(-a // b)


# ---------------------------------------------------------------------------
# Fused MLP kernel: one grid step processes one batch tile through ALL layers.
# refs = (x_ref, w0, b0, w1, b1, ..., w_{L-1}, b_{L-1}, o_ref)
# ---------------------------------------------------------------------------
def _fused_mlp_kernel(*refs, activations, n_valid_out):
    x_ref = refs[0]
    o_ref = refs[-1]
    wb = refs[1:-1]

    h = x_ref[...]  # f32 (tb, d_in)
    for l, act in enumerate(activations):
        w = wb[2 * l][...]        # bf16 (K, N) -- VMEM-resident
        b = wb[2 * l + 1][...]    # f32  (1, N)
        # bf16 x bf16 on the MXU, f32 accumulate; bias add + activation in f32.
        y = jnp.dot(h.astype(jnp.bfloat16), w,
                    preferred_element_type=jnp.float32) + b
        if act == "tanh":
            h = jnp.tanh(y)                                      # EUP
        elif act == "sigmoid":
            # exp on EUP + approx reciprocal on EUP -> keeps VALU slots free.
            h = pl.reciprocal(1.0 + jnp.exp(-y), approx=True)
        elif act == "none":
            h = y
        else:
            raise ValueError(f"unknown activation: {act}")

    # Zero the lane-padding columns of the final layer (sigmoid(0) = 0.5 there),
    # so the padded output buffer is safe to consume directly.
    if n_valid_out < h.shape[1]:
        col = lax.broadcasted_iota(jnp.int32, h.shape, 1)
        h = jnp.where(col < n_valid_out, h, 0.0)
    o_ref[...] = h.astype(o_ref.dtype)


# ---------------------------------------------------------------------------
# Wrapper: tile the batch, build BlockSpecs, single pallas_call.
# ---------------------------------------------------------------------------
def _choose_batch_tile(batch, batch_tile):
    """Pick (tile_rows, num_tiles) so that:
       - each tile is <= batch_tile rows (and a multiple of 16 for bf16 pack),
       - batch over-padding is at most ~one 16-row group per tile,
       - the grid has >= 2 steps whenever batch can feed two TensorCores with
         >=128-row (MXU-filling) tiles (v7x sharding; no-op on v5e/v6e)."""
    num_tiles = max(1, _cdiv(batch, batch_tile))
    if batch >= 2 * LANE:
        num_tiles = max(num_tiles, 2)
    tb = _round_up(_cdiv(batch, num_tiles), MIN_BATCH_TILE)
    return tb, num_tiles


def autoencoder_forward(x, params, *, batch_tile=256):
    """params: list of (w_pad_bf16, b_pad_f32, activation, d_in, d_out)."""
    batch, d_in0 = x.shape
    assert d_in0 == params[0][0].shape[0], "input width must match first layer"
    d_out_pad_last = params[-1][0].shape[1]
    d_out_last = params[-1][4]
    activations = tuple(p[2] for p in params)

    tb, num_tiles = _choose_batch_tile(batch, batch_tile)
    batch_pad = tb * num_tiles
    x_pad = x if batch_pad == batch else jnp.pad(x, ((0, batch_pad - batch), (0, 0)))
    grid = (num_tiles,)

    flat_wb = []
    for (w, b, _act, _din, _dout) in params:
        flat_wb.append(w)
        flat_wb.append(b)

    # ---- VMEM budget (conservative: weights double-buffered worst case) ----
    bytes_wb = sum(int(a.size) * a.dtype.itemsize for a in flat_wb)
    max_width = max([d_in0] + [p[0].shape[1] for p in params])
    vmem_est = (2 * bytes_wb                      # resident weights/biases
                + 2 * tb * d_in0 * 4              # double-buffered input tile
                + 2 * tb * d_out_pad_last * 4     # double-buffered output tile
                + 4 * tb * max_width * 4          # live f32 intermediates
                + (2 << 20))                      # margin
    vmem_limit = int(min(max(vmem_est, 32 << 20), 64 << 20))

    # ---- Advisory cost estimate for the XLA scheduler ----------------------
    flops = 2 * batch_pad * sum(p[0].shape[0] * p[0].shape[1] for p in params)
    transcendentals = batch_pad * sum(p[0].shape[1] for p in params)
    bytes_accessed = (int(x_pad.size) * 4 + bytes_wb
                      + batch_pad * d_out_pad_last * 4)
    cost = pl.CostEstimate(flops=flops, transcendentals=transcendentals,
                           bytes_accessed=bytes_accessed)

    def build(single_buffer_weights):
        def const_spec(shape):
            if single_buffer_weights:
                # Constant index_map -> second buffer is pure waste.
                return pl.BlockSpec(shape, lambda i: (0, 0),
                                    pipeline_mode=pl.Buffered(1))
            return pl.BlockSpec(shape, lambda i: (0, 0))

        in_specs = [pl.BlockSpec((tb, d_in0), lambda i: (i, 0))]
        for (w, b, _act, _din, _dout) in params:
            in_specs.append(const_spec(w.shape))
            in_specs.append(const_spec(b.shape))

        return pl.pallas_call(
            functools.partial(_fused_mlp_kernel, activations=activations,
                              n_valid_out=d_out_last),
            out_shape=jax.ShapeDtypeStruct((batch_pad, d_out_pad_last), jnp.float32),
            grid=grid,
            in_specs=in_specs,
            out_specs=pl.BlockSpec((tb, d_out_pad_last), lambda i: (i, 0)),
            compiler_params=pltpu.CompilerParams(
                dimension_semantics=("parallel",),   # v7x: shard batch tiles over 2 TCs
                vmem_limit_bytes=vmem_limit,
            ),
            cost_estimate=cost,
        )

    try:
        out = build(True)(x_pad, *flat_wb)
    except Exception:
        # pipeline_mode=pl.Buffered(1) unsupported on this jax build: fall back
        # to default double-buffered weight specs (correctness unchanged).
        out = build(False)(x_pad, *flat_wb)

    return out[:batch, :d_out_last]


# ---------------------------------------------------------------------------
# Parameter construction (deterministic; mirrors the PyTorch __init__)
# ---------------------------------------------------------------------------
def xavier_uniform(key, fan_in, fan_out):
    # nn.init.xavier_uniform_ bound is symmetric in (fan_in, fan_out), so we
    # can build the transposed (fan_in, fan_out) layout directly.
    bound = float(jnp.sqrt(6.0 / (fan_in + fan_out)))
    return jax.random.uniform(
        key, (fan_in, fan_out), dtype=jnp.float32, minval=-bound, maxval=bound
    )


def init_autoencoder_params(key, inputD, encoding_dim):
    # Layer spec list: (d_in, d_out, activation)
    layer_dims = []
    dims = [inputD] + list(encoding_dim)
    for l in range(len(encoding_dim)):                       # encoder
        layer_dims.append((dims[l], dims[l + 1], "tanh"))
    for l in range(len(encoding_dim) - 1, 0, -1):            # decoder (hidden)
        layer_dims.append((encoding_dim[l], encoding_dim[l - 1], "tanh"))
    layer_dims.append((encoding_dim[0], inputD, "sigmoid"))  # decoder (output)

    params = []
    first = True
    for (d_in, d_out, act) in layer_dims:
        key, sub = jax.random.split(key)
        w = xavier_uniform(sub, d_in, d_out)

        # First layer keeps K = d_in unpadded (the raw input then needs no
        # feature-pad copy); later layers' K must match the previous layer's
        # lane-padded output width.  N is always lane-padded to 128.
        d_in_pad = d_in if first else _round_up(d_in, LANE)
        d_out_pad = _round_up(d_out, LANE)

        # Weights in bf16 (MXU-native, halves weight DMA/VMEM); bias stays f32
        # (tiny, added after the f32 accumulate).  Zero padding keeps the valid
        # region exact and padded activation columns exactly zero through tanh.
        w_pad = jnp.zeros((d_in_pad, d_out_pad), jnp.bfloat16)
        w_pad = w_pad.at[:d_in, :d_out].set(w.astype(jnp.bfloat16))
        b_pad = jnp.zeros((1, d_out_pad), jnp.float32).at[:, :d_out].set(0.01)
        params.append((w_pad, b_pad, act, d_in, d_out))
        first = False
    return params


def reference_forward(x, params):
    """Pure-JAX reference mirroring the kernel math (bf16 matmuls, f32 acts)."""
    h = x.astype(jnp.float32)
    for (w, b, act, _d_in, _d_out) in params:
        y = jnp.dot(h.astype(jnp.bfloat16), w,
                    preferred_element_type=jnp.float32) + b
        if act == "tanh":
            h = jnp.tanh(y)
        else:  # sigmoid
            h = 1.0 / (1.0 + jnp.exp(-y))
    return h[:, :params[-1][4]]


# ---------------------------------------------------------------------------
if __name__ == "__main__":
    inputD = 64
    encoding_dim = [32, 16]
    batch = 8

    key = jax.random.PRNGKey(0)
    key_x, key_p = jax.random.split(key)

    x = jax.random.normal(key_x, (batch, inputD), dtype=jnp.float32)
    params = init_autoencoder_params(key_p, inputD, encoding_dim)

    out = autoencoder_forward(x, params)
    out = jax.block_until_ready(out)

    assert out.shape == (batch, inputD)
    assert out.dtype == jnp.float32
    assert bool(jnp.all(jnp.isfinite(out)))
    # Sigmoid output must live in [0, 1].
    assert bool(jnp.all((out >= 0.0) & (out <= 1.0)))

    ref = reference_forward(x, params)
    # bf16 matmuls + approx-reciprocal sigmoid: loose-but-meaningful tolerance.
    err = float(jnp.max(jnp.abs(out - ref)))
    assert bool(jnp.allclose(out, ref, atol=2e-3, rtol=2e-3)), err

    print("KERNEL_OK")
</pallas_src>

<mosaic_0001>
module attributes {stable_mosaic.version = 11 : i64} {
  func.func @_fused_mlp_kernel(%arg0: i32, %arg1: memref<16x64xf32, #tpu.memory_space<vmem>>, %arg2: memref<64x128xbf16, #tpu.memory_space<vmem>>, %arg3: memref<1x128xf32, #tpu.memory_space<vmem>>, %arg4: memref<128x128xbf16, #tpu.memory_space<vmem>>, %arg5: memref<1x128xf32, #tpu.memory_space<vmem>>, %arg6: memref<128x128xbf16, #tpu.memory_space<vmem>>, %arg7: memref<1x128xf32, #tpu.memory_space<vmem>>, %arg8: memref<128x128xbf16, #tpu.memory_space<vmem>>, %arg9: memref<1x128xf32, #tpu.memory_space<vmem>>, %arg10: memref<16x128xf32, #tpu.memory_space<vmem>>) attributes {dimension_semantics = [#tpu.dimension_semantics<parallel>], iteration_bounds = array<i64: 1>, scalar_prefetch = 0 : i64, scratch_operands = 0 : i64, tpu.core_type = #tpu.core_type<tc>, window_params = [{transform_indices = @transform_0, window_bounds = array<i64: 16, 64>}, {pipeline_mode = #tpu.pipeline_mode<synchronous>, transform_indices = @transform_1, window_bounds = array<i64: 64, 128>}, {pipeline_mode = #tpu.pipeline_mode<synchronous>, transform_indices = @transform_2, window_bounds = array<i64: 1, 128>}, {pipeline_mode = #tpu.pipeline_mode<synchronous>, transform_indices = @transform_3, window_bounds = array<i64: 128, 128>}, {pipeline_mode = #tpu.pipeline_mode<synchronous>, transform_indices = @transform_4, window_bounds = array<i64: 1, 128>}, {pipeline_mode = #tpu.pipeline_mode<synchronous>, transform_indices = @transform_5, window_bounds = array<i64: 128, 128>}, {pipeline_mode = #tpu.pipeline_mode<synchronous>, transform_indices = @transform_6, window_bounds = array<i64: 1, 128>}, {pipeline_mode = #tpu.pipeline_mode<synchronous>, transform_indices = @transform_7, window_bounds = array<i64: 128, 128>}, {pipeline_mode = #tpu.pipeline_mode<synchronous>, transform_indices = @transform_8, window_bounds = array<i64: 1, 128>}, {transform_indices = @transform_9, window_bounds = array<i64: 16, 128>}]} {
    %c0 = arith.constant 0 : index
    %c0_0 = arith.constant 0 : index
    %0 = vector.load %arg1[%c0, %c0_0] : memref<16x64xf32, #tpu.memory_space<vmem>>, vector<16x64xf32>
    %c0_1 = arith.constant 0 : index
    %c0_2 = arith.constant 0 : index
    %1 = vector.load %arg2[%c0_1, %c0_2] : memref<64x128xbf16, #tpu.memory_space<vmem>>, vector<64x128xbf16>
    %c0_3 = arith.constant 0 : index
    %c0_4 = arith.constant 0 : index
    %2 = vector.load %arg3[%c0_3, %c0_4] : memref<1x128xf32, #tpu.memory_space<vmem>>, vector<1x128xf32>
    %3 = arith.truncf %0 : vector<16x64xf32> to vector<16x64xbf16>
    %cst = arith.constant dense<0.000000e+00> : vector<16x128xf32>
    %4 = tpu.matmul %3, %1, %cst {dimension_numbers = #tpu.dot_dimension_numbers<[1], [0], [0], [1], [0, 0, 1, 1], [], []>} : vector<16x64xbf16>, vector<64x128xbf16>, vector<16x128xf32> -> vector<16x128xf32>
    %5 = vector.broadcast %2 : vector<1x128xf32> to vector<16x128xf32>
    %6 = arith.addf %4, %5 : vector<16x128xf32>
    %7 = math.tanh %6 : vector<16x128xf32>
    %c0_5 = arith.constant 0 : index
    %c0_6 = arith.constant 0 : index
    %8 = vector.load %arg4[%c0_5, %c0_6] : memref<128x128xbf16, #tpu.memory_space<vmem>>, vector<128x128xbf16>
    %c0_7 = arith.constant 0 : index
    %c0_8 = arith.constant 0 : index
    %9 = vector.load %arg5[%c0_7, %c0_8] : memref<1x128xf32, #tpu.memory_space<vmem>>, vector<1x128xf32>
    %10 = arith.truncf %7 : vector<16x128xf32> to vector<16x128xbf16>
    %cst_9 = arith.constant dense<0.000000e+00> : vector<16x128xf32>
    %11 = tpu.matmul %10, %8, %cst_9 {dimension_numbers = #tpu.dot_dimension_numbers<[1], [0], [0], [1], [0, 0, 1, 1], [], []>} : vector<16x128xbf16>, vector<128x128xbf16>, vector<16x128xf32> -> vector<16x128xf32>
    %12 = vector.broadcast %9 : vector<1x128xf32> to vector<16x128xf32>
    %13 = arith.addf %11, %12 : vector<16x128xf32>
    %14 = math.tanh %13 : vector<16x128xf32>
    %c0_10 = arith.constant 0 : index
    %c0_11 = arith.constant 0 : index
    %15 = vector.load %arg6[%c0_10, %c0_11] : memref<128x128xbf16, #tpu.memory_space<vmem>>, vector<128x128xbf16>
    %c0_12 = arith.constant 0 : index
    %c0_13 = arith.constant 0 : index
    %16 = vector.load %arg7[%c0_12, %c0_13] : memref<1x128xf32, #tpu.memory_space<vmem>>, vector<1x128xf32>
    %17 = arith.truncf %14 : vector<16x128xf32> to vector<16x128xbf16>
    %cst_14 = arith.constant dense<0.000000e+00> : vector<16x128xf32>
    %18 = tpu.matmul %17, %15, %cst_14 {dimension_numbers = #tpu.dot_dimension_numbers<[1], [0], [0], [1], [0, 0, 1, 1], [], []>} : vector<16x128xbf16>, vector<128x128xbf16>, vector<16x128xf32> -> vector<16x128xf32>
    %19 = vector.broadcast %16 : vector<1x128xf32> to vector<16x128xf32>
    %20 = arith.addf %18, %19 : vector<16x128xf32>
    %21 = math.tanh %20 : vector<16x128xf32>
    %c0_15 = arith.constant 0 : index
    %c0_16 = arith.constant 0 : index
    %22 = vector.load %arg8[%c0_15, %c0_16] : memref<128x128xbf16, #tpu.memory_space<vmem>>, vector<128x128xbf16>
    %c0_17 = arith.constant 0 : index
    %c0_18 = arith.constant 0 : index
    %23 = vector.load %arg9[%c0_17, %c0_18] : memref<1x128xf32, #tpu.memory_space<vmem>>, vector<1x128xf32>
    %24 = arith.truncf %21 : vector<16x128xf32> to vector<16x128xbf16>
    %cst_19 = arith.constant dense<0.000000e+00> : vector<16x128xf32>
    %25 = tpu.matmul %24, %22, %cst_19 {dimension_numbers = #tpu.dot_dimension_numbers<[1], [0], [0], [1], [0, 0, 1, 1], [], []>} : vector<16x128xbf16>, vector<128x128xbf16>, vector<16x128xf32> -> vector<16x128xf32>
    %26 = vector.broadcast %23 : vector<1x128xf32> to vector<16x128xf32>
    %27 = arith.addf %25, %26 : vector<16x128xf32>
    %cst_20 = arith.constant 0.000000e+00 : f32
    %28 = vector.broadcast %cst_20 : f32 to vector<16x128xf32>
    %29 = arith.subf %28, %27 : vector<16x128xf32>
    %30 = math.exp %29 : vector<16x128xf32>
    %cst_21 = arith.constant 1.000000e+00 : f32
    %31 = vector.broadcast %cst_21 : f32 to vector<16x128xf32>
    %32 = arith.addf %31, %30 : vector<16x128xf32>
    %33 = tpu.reciprocal %32 {approx = true} : vector<16x128xf32> -> vector<16x128xf32>
    %34 = tpu.iota {dimensions = array<i32: 1>} : vector<16x128xi32>
    %c64_i32 = arith.constant 64 : i32
    %35 = vector.broadcast %c64_i32 : i32 to vector<16x128xi32>
    %36 = arith.cmpi slt, %34, %35 : vector<16x128xi32>
    %cst_22 = arith.constant 0.000000e+00 : f32
    %37 = vector.broadcast %cst_22 : f32 to vector<16x128xf32>
    %38 = arith.select %36, %33, %37 : vector<16x128xi1>, vector<16x128xf32>
    %c0_23 = arith.constant 0 : index
    %c0_24 = arith.constant 0 : index
    %39 = vector.load %arg10[%c0_23, %c0_24] : memref<16x128xf32, #tpu.memory_space<vmem>>, vector<16x128xf32>
    tpu.vector_store %arg10[%c0_23, %c0_24], %38 {strides = array<i32>} : memref<16x128xf32, #tpu.memory_space<vmem>>, vector<16x128xf32>,
    return
  }
  func.func @transform_0(%arg0: i32) -> (i32, i32) {
    %c0_i32 = arith.constant 0 : i32
    %c0_i32_0 = arith.constant 0 : i32
    return %arg0, %c0_i32 : i32, i32
  }
  func.func @transform_1(%arg0: i32) -> (i32, i32) {
    %c0_i32 = arith.constant 0 : i32
    %c0_i32_0 = arith.constant 0 : i32
    %c0_i32_1 = arith.constant 0 : i32
    return %c0_i32, %c0_i32_0 : i32, i32
  }
  func.func @transform_2(%arg0: i32) -> (i32, i32) {
    %c0_i32 = arith.constant 0 : i32
    %c0_i32_0 = arith.constant 0 : i32
    %c0_i32_1 = arith.constant 0 : i32
    return %c0_i32, %c0_i32_0 : i32, i32
  }
  func.func @transform_3(%arg0: i32) -> (i32, i32) {
    %c0_i32 = arith.constant 0 : i32
    %c0_i32_0 = arith.constant 0 : i32
    %c0_i32_1 = arith.constant 0 : i32
    return %c0_i32, %c0_i32_0 : i32, i32
  }
  func.func @transform_4(%arg0: i32) -> (i32, i32) {
    %c0_i32 = arith.constant 0 : i32
    %c0_i32_0 = arith.constant 0 : i32
    %c0_i32_1 = arith.constant 0 : i32
    return %c0_i32, %c0_i32_0 : i32, i32
  }
  func.func @transform_5(%arg0: i32) -> (i32, i32) {
    %c0_i32 = arith.constant 0 : i32
    %c0_i32_0 = arith.constant 0 : i32
    %c0_i32_1 = arith.constant 0 : i32
    return %c0_i32, %c0_i32_0 : i32, i32
  }
  func.func @transform_6(%arg0: i32) -> (i32, i32) {
    %c0_i32 = arith.constant 0 : i32
    %c0_i32_0 = arith.constant 0 : i32
    %c0_i32_1 = arith.constant 0 : i32
    return %c0_i32, %c0_i32_0 : i32, i32
  }
  func.func @transform_7(%arg0: i32) -> (i32, i32) {
    %c0_i32 = arith.constant 0 : i32
    %c0_i32_0 = arith.constant 0 : i32
    %c0_i32_1 = arith.constant 0 : i32
    return %c0_i32, %c0_i32_0 : i32, i32
  }
  func.func @transform_8(%arg0: i32) -> (i32, i32) {
    %c0_i32 = arith.constant 0 : i32
    %c0_i32_0 = arith.constant 0 : i32
    %c0_i32_1 = arith.constant 0 : i32
    return %c0_i32, %c0_i32_0 : i32, i32
  }
  func.func @transform_9(%arg0: i32) -> (i32, i32) {
    %c0_i32 = arith.constant 0 : i32
    %c0_i32_0 = arith.constant 0 : i32
    return %arg0, %c0_i32 : i32, i32
  }
}

module attributes {stable_mosaic.version = 11 : i64} {
  func.func @_fused_mlp_kernel(%arg0: i32, %arg1: memref<16x64xf32, #tpu.memory_space<vmem>>, %arg2: memref<64x128xbf16, #tpu.memory_space<vmem>>, %arg3: memref<1x128xf32, #tpu.memory_space<vmem>>, %arg4: memref<128x128xbf16, #tpu.memory_space<vmem>>, %arg5: memref<1x128xf32, #tpu.memory_space<vmem>>, %arg6: memref<128x128xbf16, #tpu.memory_space<vmem>>, %arg7: memref<1x128xf32, #tpu.memory_space<vmem>>, %arg8: memref<128x128xbf16, #tpu.memory_space<vmem>>, %arg9: memref<1x128xf32, #tpu.memory_space<vmem>>, %arg10: memref<16x128xf32, #tpu.memory_space<vmem>>) attributes {dimension_semantics = [#tpu.dimension_semantics<parallel>], iteration_bounds = array<i64: 1>, scalar_prefetch = 0 : i64, scratch_operands = 0 : i64, tpu.core_type = #tpu.core_type<tc>, window_params = [{transform_indices = @transform_0, window_bounds = array<i64: 16, 64>}, {pipeline_mode = #tpu.pipeline_mode<synchronous>, transform_indices = @transform_1, window_bounds = array<i64: 64, 128>}, {pipeline_mode = #tpu.pipeline_mode<synchronous>, transform_indices = @transform_2, window_bounds = array<i64: 1, 128>}, {pipeline_mode = #tpu.pipeline_mode<synchronous>, transform_indices = @transform_3, window_bounds = array<i64: 128, 128>}, {pipeline_mode = #tpu.pipeline_mode<synchronous>, transform_indices = @transform_4, window_bounds = array<i64: 1, 128>}, {pipeline_mode = #tpu.pipeline_mode<synchronous>, transform_indices = @transform_5, window_bounds = array<i64: 128, 128>}, {pipeline_mode = #tpu.pipeline_mode<synchronous>, transform_indices = @transform_6, window_bounds = array<i64: 1, 128>}, {pipeline_mode = #tpu.pipeline_mode<synchronous>, transform_indices = @transform_7, window_bounds = array<i64: 128, 128>}, {pipeline_mode = #tpu.pipeline_mode<synchronous>, transform_indices = @transform_8, window_bounds = array<i64: 1, 128>}, {transform_indices = @transform_9, window_bounds = array<i64: 16, 128>}]} {
    %c0 = arith.constant 0 : index
    %c0_0 = arith.constant 0 : index
    %0 = vector.load %arg1[%c0, %c0_0] : memref<16x64xf32, #tpu.memory_space<vmem>>, vector<16x64xf32>
    %c0_1 = arith.constant 0 : index
    %c0_2 = arith.constant 0 : index
    %1 = vector.load %arg2[%c0_1, %c0_2] : memref<64x128xbf16, #tpu.memory_space<vmem>>, vector<64x128xbf16>
    %c0_3 = arith.constant 0 : index
    %c0_4 = arith.constant 0 : index
    %2 = vector.load %arg3[%c0_3, %c0_4] : memref<1x128xf32, #tpu.memory_space<vmem>>, vector<1x128xf32>
    %3 = arith.truncf %0 : vector<16x64xf32> to vector<16x64xbf16>
    %cst = arith.constant dense<0.000000e+00> : vector<16x128xf32>
    %4 = tpu.matmul %3, %1, %cst {dimension_numbers = #tpu.dot_dimension_numbers<[1], [0], [0], [1], [0, 0, 1, 1], [], []>} : vector<16x64xbf16>, vector<64x128xbf16>, vector<16x128xf32> -> vector<16x128xf32>
    %5 = vector.broadcast %2 : vector<1x128xf32> to vector<16x128xf32>
    %6 = arith.addf %4, %5 : vector<16x128xf32>
    %7 = math.tanh %6 : vector<16x128xf32>
    %c0_5 = arith.constant 0 : index
    %c0_6 = arith.constant 0 : index
    %8 = vector.load %arg4[%c0_5, %c0_6] : memref<128x128xbf16, #tpu.memory_space<vmem>>, vector<128x128xbf16>
    %c0_7 = arith.constant 0 : index
    %c0_8 = arith.constant 0 : index
    %9 = vector.load %arg5[%c0_7, %c0_8] : memref<1x128xf32, #tpu.memory_space<vmem>>, vector<1x128xf32>
    %10 = arith.truncf %7 : vector<16x128xf32> to vector<16x128xbf16>
    %cst_9 = arith.constant dense<0.000000e+00> : vector<16x128xf32>
    %11 = tpu.matmul %10, %8, %cst_9 {dimension_numbers = #tpu.dot_dimension_numbers<[1], [0], [0], [1], [0, 0, 1, 1], [], []>} : vector<16x128xbf16>, vector<128x128xbf16>, vector<16x128xf32> -> vector<16x128xf32>
    %12 = vector.broadcast %9 : vector<1x128xf32> to vector<16x128xf32>
    %13 = arith.addf %11, %12 : vector<16x128xf32>
    %14 = math.tanh %13 : vector<16x128xf32>
    %c0_10 = arith.constant 0 : index
    %c0_11 = arith.constant 0 : index
    %15 = vector.load %arg6[%c0_10, %c0_11] : memref<128x128xbf16, #tpu.memory_space<vmem>>, vector<128x128xbf16>
    %c0_12 = arith.constant 0 : index
    %c0_13 = arith.constant 0 : index
    %16 = vector.load %arg7[%c0_12, %c0_13] : memref<1x128xf32, #tpu.memory_space<vmem>>, vector<1x128xf32>
    %17 = arith.truncf %14 : vector<16x128xf32> to vector<16x128xbf16>
    %cst_14 = arith.constant dense<0.000000e+00> : vector<16x128xf32>
    %18 = tpu.matmul %17, %15, %cst_14 {dimension_numbers = #tpu.dot_dimension_numbers<[1], [0], [0], [1], [0, 0, 1, 1], [], []>} : vector<16x128xbf16>, vector<128x128xbf16>, vector<16x128xf32> -> vector<16x128xf32>
    %19 = vector.broadcast %16 : vector<1x128xf32> to vector<16x128xf32>
    %20 = arith.addf %18, %19 : vector<16x128xf32>
    %21 = math.tanh %20 : vector<16x128xf32>
    %c0_15 = arith.constant 0 : index
    %c0_16 = arith.constant 0 : index
    %22 = vector.load %arg8[%c0_15, %c0_16] : memref<128x128xbf16, #tpu.memory_space<vmem>>, vector<128x128xbf16>
    %c0_17 = arith.constant 0 : index
    %c0_18 = arith.constant 0 : index
    %23 = vector.load %arg9[%c0_17, %c0_18] : memref<1x128xf32, #tpu.memory_space<vmem>>, vector<1x128xf32>
    %24 = arith.truncf %21 : vector<16x128xf32> to vector<16x128xbf16>
    %cst_19 = arith.constant dense<0.000000e+00> : vector<16x128xf32>
    %25 = tpu.matmul %24, %22, %cst_19 {dimension_numbers = #tpu.dot_dimension_numbers<[1], [0], [0], [1], [0, 0, 1, 1], [], []>} : vector<16x128xbf16>, vector<128x128xbf16>, vector<16x128xf32> -> vector<16x128xf32>
    %26 = vector.broadcast %23 : vector<1x128xf32> to vector<16x128xf32>
    %27 = arith.addf %25, %26 : vector<16x128xf32>
    %cst_20 = arith.constant 0.000000e+00 : f32
    %28 = vector.broadcast %cst_20 : f32 to vector<16x128xf32>
    %29 = arith.subf %28, %27 : vector<16x128xf32>
    %30 = math.exp %29 : vector<16x128xf32>
    %cst_21 = arith.constant 1.000000e+00 : f32
    %31 = vector.broadcast %cst_21 : f32 to vector<16x128xf32>
    %32 = arith.addf %31, %30 : vector<16x128xf32>
    %33 = tpu.reciprocal %32 {approx = true} : vector<16x128xf32> -> vector<16x128xf32>
    %34 = tpu.iota {dimensions = array<i32: 1>} : vector<16x128xi32>
    %c64_i32 = arith.constant 64 : i32
    %35 = vector.broadcast %c64_i32 : i32 to vector<16x128xi32>
    %36 = arith.cmpi slt, %34, %35 : vector<16x128xi32>
    %cst_22 = arith.constant 0.000000e+00 : f32
    %37 = vector.broadcast %cst_22 : f32 to vector<16x128xf32>
    %38 = arith.select %36, %33, %37 : vector<16x128xi1>, vector<16x128xf32>
    %c0_23 = arith.constant 0 : index
    %c0_24 = arith.constant 0 : index
    %39 = vector.load %arg10[%c0_23, %c0_24] : memref<16x128xf32, #tpu.memory_space<vmem>>, vector<16x128xf32>
    tpu.vector_store %arg10[%c0_23, %c0_24], %38 {strides = array<i32>} : memref<16x128xf32, #tpu.memory_space<vmem>>, vector<16x128xf32>,
    return
  }
  func.func @transform_0(%arg0: i32) -> (i32, i32) {
    %c0_i32 = arith.constant 0 : i32
    %c0_i32_0 = arith.constant 0 : i32
    return %arg0, %c0_i32 : i32, i32
  }
  func.func @transform_1(%arg0: i32) -> (i32, i32) {
    %c0_i32 = arith.constant 0 : i32
    %c0_i32_0 = arith.constant 0 : i32
    %c0_i32_1 = arith.constant 0 : i32
    return %c0_i32, %c0_i32_0 : i32, i32
  }
  func.func @transform_2(%arg0: i32) -> (i32, i32) {
    %c0_i32 = arith.constant 0 : i32
    %c0_i32_0 = arith.constant 0 : i32
    %c0_i32_1 = arith.constant 0 : i32
    return %c0_i32, %c0_i32_0 : i32, i32
  }
  func.func @transform_3(%arg0: i32) -> (i32, i32) {
    %c0_i32 = arith.constant 0 : i32
    %c0_i32_0 = arith.constant 0 : i32
    %c0_i32_1 = arith.constant 0 : i32
    return %c0_i32, %c0_i32_0 : i32, i32
  }
  func.func @transform_4(%arg0: i32) -> (i32, i32) {
    %c0_i32 = arith.constant 0 : i32
    %c0_i32_0 = arith.constant 0 : i32
    %c0_i32_1 = arith.constant 0 : i32
    return %c0_i32, %c0_i32_0 : i32, i32
  }
  func.func @transform_5(%arg0: i32) -> (i32, i32) {
    %c0_i32 = arith.constant 0 : i32
    %c0_i32_0 = arith.constant 0 : i32
    %c0_i32_1 = arith.constant 0 : i32
    return %c0_i32, %c0_i32_0 : i32, i32
  }
  func.func @transform_6(%arg0: i32) -> (i32, i32) {
    %c0_i32 = arith.constant 0 : i32
    %c0_i32_0 = arith.constant 0 : i32
    %c0_i32_1 = arith.constant 0 : i32
    return %c0_i32, %c0_i32_0 : i32, i32
  }
  func.func @transform_7(%arg0: i32) -> (i32, i32) {
    %c0_i32 = arith.constant 0 : i32
    %c0_i32_0 = arith.constant 0 : i32
    %c0_i32_1 = arith.constant 0 : i32
    return %c0_i32, %c0_i32_0 : i32, i32
  }
  func.func @transform_8(%arg0: i32) -> (i32, i32) {
    %c0_i32 = arith.constant 0 : i32
    %c0_i32_0 = arith.constant 0 : i32
    %c0_i32_1 = arith.constant 0 : i32
    return %c0_i32, %c0_i32_0 : i32, i32
  }
  func.func @transform_9(%arg0: i32) -> (i32, i32) {
    %c0_i32 = arith.constant 0 : i32
    %c0_i32_0 = arith.constant 0 : i32
    return %arg0, %c0_i32 : i32, i32
  }
}

</mosaic_0001>

<llo_original>
// kernel: tpu_custom_call.1
$region0: #{tpu_custom_call.1}
  #allocation0 [shape = 'u32[]', space=smem, size = 0x4, offset = 0x4, fixed_abs, tag = 'smem constant byte address 0x4 - core index']
  #allocation1 [shape = 'u32[144,128]{1,0:T(1,128)}', space=vmem, size = 0x12000, scoped, tag = 'internal scratch']
  %s0 = inlined_call_operand.hbm [shape: f32[16,64], index: 0, kind: input, shape index: {}]
  %s1 = inlined_call_operand.hbm [shape: bf16[64,128], index: 1, kind: input, shape index: {}]
  %s2 = inlined_call_operand.vmem [shape: f32[1,128], index: 2, kind: input, shape index: {}]
  %s3 = inlined_call_operand.hbm [shape: bf16[128,128], index: 3, kind: input, shape index: {}]
  %s4 = inlined_call_operand.vmem [shape: f32[1,128], index: 4, kind: input, shape index: {}]
  %s5 = inlined_call_operand.hbm [shape: bf16[128,128], index: 5, kind: input, shape index: {}]
  %s6 = inlined_call_operand.vmem [shape: f32[1,128], index: 6, kind: input, shape index: {}]
  %s7 = inlined_call_operand.hbm [shape: bf16[128,128], index: 7, kind: input, shape index: {}]
  %s8 = inlined_call_operand.vmem [shape: f32[1,128], index: 8, kind: input, shape index: {}]
  %s9 = inlined_call_operand.hbm [shape: f32[16,128], index: 9, kind: output, shape index: {}]
  %s10 = sld [smem:[#allocation0]]
  $region66: #{tpu_custom_call.1} parent=0
    _
  %s12 = ssub.s32 1, %s10
  %s13 = scalar_select 0, %s12, %s10
  $region1: #{tpu_custom_call.1} parent=0
    #allocation2 [shape = 'u8[8192]{0}', space=vmem, size = 0x2000, scoped, tag = 'input window, operand 0, single buffered']
    #allocation3 [shape = 's32[1]{0}', space=sflag, size = 0x4, scoped, tag = 'scoped memory for tpu_custom_call.1']
    #allocation4 [shape = 's32[1]{0}', space=sflag, size = 0x4, scoped, tag = 'scoped memory for tpu_custom_call.1']
    #allocation5 [shape = 'u8[16384]{0}', space=vmem, size = 0x4000, scoped, tag = 'input window, operand 1, single buffered']
    #allocation6 [shape = 's32[1]{0}', space=sflag, size = 0x4, scoped, tag = 'scoped memory for tpu_custom_call.1']
    #allocation7 [shape = 'u8[32768]{0}', space=vmem, size = 0x8000, scoped, tag = 'input window, operand 3, single buffered']
    #allocation8 [shape = 'u8[32768]{0}', space=vmem, size = 0x8000, scoped, tag = 'input window, operand 5, single buffered']
    #allocation9 [shape = 's32[1]{0}', space=sflag, size = 0x4, scoped, tag = 'scoped memory for tpu_custom_call.1']
    #allocation10 [shape = 'u8[32768]{0}', space=vmem, size = 0x8000, scoped, tag = 'input window, operand 7, single buffered']
    #allocation11 [shape = 'u8[8192]{0}', space=vmem, size = 0x2000, scoped, tag = 'output window, operand 0, single buffered']
    %14 = vsyncpa [#allocation3], 0
    %15 = vsyncpa [#allocation6], 0
    %16 = vsyncpa [#allocation9], 0
    %17 = vsyncpa [#allocation4], 0
    // Predicated region
    $region2: #{tpu_custom_call.1} parent=1 // pred_check
      _
    $region3: #{tpu_custom_call.1} parent=1 // pred_check_branch
      %19 = sbr.rel (0) target = $region5
    $region4: #{tpu_custom_call.1} parent=1 // pred_region
      %s21 = ssub.s32 256, 256
      %22 = vsyncadd [#allocation3], %s21
      %s23 = sshll.u32 [#allocation2], 4
      %s24 = int_to_ptr.vmem [resolvable:$true] %s23
      %29 = dma.hbm_to_vmem [thread:$0]  %s0, 256, %s24, [#allocation3], 128, 128, 8
    $region5: #{tpu_custom_call.1} parent=1 // pred_fallthru
      _
    // Predicated region
    $region6: #{tpu_custom_call.1} parent=1 // pred_check
      _
    $region7: #{tpu_custom_call.1} parent=1 // pred_check_branch
      %31 = sbr.rel (0) target = $region9
    $region8: #{tpu_custom_call.1} parent=1 // pred_region
      %s33 = ssub.s32 512, 512
      %34 = vsyncadd [#allocation6], %s33
      %s35 = sshll.u32 [#allocation5], 4
      %s36 = int_to_ptr.vmem [resolvable:$true] %s35
      %41 = dma.hbm_to_vmem [thread:$0]  %s1, 512, %s36, [#allocation6], 64, 64, 4
    $region9: #{tpu_custom_call.1} parent=1 // pred_fallthru
      _
    // Predicated region
    $region10: #{tpu_custom_call.1} parent=1 // pred_check
      _
    $region11: #{tpu_custom_call.1} parent=1 // pred_check_branch
      %43 = sbr.rel (0) target = $region13
    $region12: #{tpu_custom_call.1} parent=1 // pred_region
      _
    $region13: #{tpu_custom_call.1} parent=1 // pred_fallthru
      _
    // Predicated region
    $region14: #{tpu_custom_call.1} parent=1 // pred_check
      _
    $region15: #{tpu_custom_call.1} parent=1 // pred_check_branch
      %45 = sbr.rel (0) target = $region17
    $region16: #{tpu_custom_call.1} parent=1 // pred_region
      %s47 = ssub.s32 1024, 1024
      %48 = vsyncadd [#allocation6], %s47
      %s49 = sshll.u32 [#allocation7], 4
      %s50 = int_to_ptr.vmem [resolvable:$true] %s49
      %55 = dma.hbm_to_vmem [thread:$0]  %s3, 1024, %s50, [#allocation6], 64, 64, 4
    $region17: #{tpu_custom_call.1} parent=1 // pred_fallthru
      _
    // Predicated region
    $region18: #{tpu_custom_call.1} parent=1 // pred_check
      _
    $region19: #{tpu_custom_call.1} parent=1 // pred_check_branch
      %57 = sbr.rel (0) target = $region21
    $region20: #{tpu_custom_call.1} parent=1 // pred_region
      _
    $region21: #{tpu_custom_call.1} parent=1 // pred_fallthru
      _
    // Predicated region
    $region22: #{tpu_custom_call.1} parent=1 // pred_check
      _
    $region23: #{tpu_custom_call.1} parent=1 // pred_check_branch
      %59 = sbr.rel (0) target = $region25
    $region24: #{tpu_custom_call.1} parent=1 // pred_region
      %s61 = ssub.s32 1024, 1024
      %62 = vsyncadd [#allocation9], %s61
      %s63 = sshll.u32 [#allocation8], 4
      %s64 = int_to_ptr.vmem [resolvable:$true] %s63
      %69 = dma.hbm_to_vmem [thread:$0]  %s5, 1024, %s64, [#allocation9], 64, 64, 4
    $region25: #{tpu_custom_call.1} parent=1 // pred_fallthru
      _
    // Predicated region
    $region26: #{tpu_custom_call.1} parent=1 // pred_check
      _
    $region27: #{tpu_custom_call.1} parent=1 // pred_check_branch
      %71 = sbr.rel (0) target = $region29
    $region28: #{tpu_custom_call.1} parent=1 // pred_region
      _
    $region29: #{tpu_custom_call.1} parent=1 // pred_fallthru
      _
    // Predicated region
    $region30: #{tpu_custom_call.1} parent=1 // pred_check
      _
    $region31: #{tpu_custom_call.1} parent=1 // pred_check_branch
      %73 = sbr.rel (0) target = $region33
    $region32: #{tpu_custom_call.1} parent=1 // pred_region
      %s75 = ssub.s32 1024, 1024
      %76 = vsyncadd [#allocation9], %s75
      %s77 = sshll.u32 [#allocation10], 4
      %s78 = int_to_ptr.vmem [resolvable:$true] %s77
      %83 = dma.hbm_to_vmem [thread:$0]  %s7, 1024, %s78, [#allocation9], 64, 64, 4
    $region33: #{tpu_custom_call.1} parent=1 // pred_fallthru
      _
    // Predicated region
    $region34: #{tpu_custom_call.1} parent=1 // pred_check
      _
    $region35: #{tpu_custom_call.1} parent=1 // pred_check_branch
      %85 = sbr.rel (0) target = $region37
    $region36: #{tpu_custom_call.1} parent=1 // pred_region
      _
    $region37: #{tpu_custom_call.1} parent=1 // pred_fallthru
      _
    // Predicated region
    $region38: #{tpu_custom_call.1} parent=1 // pred_check
      _
    $region39: #{tpu_custom_call.1} parent=1 // pred_check_branch
      %87 = sbr.rel (0) target = $region41
    $region40: #{tpu_custom_call.1} parent=1 // pred_region
      %88 = dma.done [#allocation3], 256
    $region41: #{tpu_custom_call.1} parent=1 // pred_fallthru
      _
    // Predicated region
    $region42: #{tpu_custom_call.1} parent=1 // pred_check
      _
    $region43: #{tpu_custom_call.1} parent=1 // pred_check_branch
      %90 = sbr.rel (0) target = $region45
    $region44: #{tpu_custom_call.1} parent=1 // pred_region
      %91 = dma.done [#allocation6], 512
    $region45: #{tpu_custom_call.1} parent=1 // pred_fallthru
      _
    // Predicated region
    $region46: #{tpu_custom_call.1} parent=1 // pred_check
      _
    $region47: #{tpu_custom_call.1} parent=1 // pred_check_branch
      %93 = sbr.rel (0) target = $region49
    $region48: #{tpu_custom_call.1} parent=1 // pred_region
      %94 = dma.done [#allocation6], 1024
    $region49: #{tpu_custom_call.1} parent=1 // pred_fallthru
      _
    // Predicated region
    $region50: #{tpu_custom_call.1} parent=1 // pred_check
      _
    $region51: #{tpu_custom_call.1} parent=1 // pred_check_branch
      %96 = sbr.rel (0) target = $region53
    $region52: #{tpu_custom_call.1} parent=1 // pred_region
      %97 = dma.done [#allocation9], 1024
    $region53: #{tpu_custom_call.1} parent=1 // pred_fallthru
      _
    // Predicated region
    $region54: #{tpu_custom_call.1} parent=1 // pred_check
      _
    $region55: #{tpu_custom_call.1} parent=1 // pred_check_branch
      %99 = sbr.rel (0) target = $region57
    $region56: #{tpu_custom_call.1} parent=1 // pred_region
      %100 = dma.done [#allocation9], 1024
    $region57: #{tpu_custom_call.1} parent=1 // pred_fallthru
      _
    %v102 = vld [vmem:[#allocation2] sm:$0xff]
    %v103 = vld [vmem:[#allocation2 + $0x8] sm:$0xff]
    %v104 = vld [vmem:[#allocation5] sm:$0xf]
    %v105 = vld [vmem:[#allocation5 + $0x4] sm:$0xf]
    %v106 = vld [vmem:[#allocation5 + $0x8] sm:$0xf]
    %v107 = vld [vmem:[#allocation5 + $0xc] sm:$0xf]
    %v108 = vld [vmem:[#allocation5 + $0x10] sm:$0xf]
    %v109 = vld [vmem:[#allocation5 + $0x14] sm:$0xf]
    %v110 = vld [vmem:[#allocation5 + $0x18] sm:$0xf]
    %v111 = vld [vmem:[#allocation5 + $0x1c] sm:$0xf]
    %v112 = vld [vmem:[%s2] sm:$0x1]
    %v113 = vpack.c.bf16 %v103, %v102
    %v115 = vlaneseq
    %v116 = vshrl.u32 %v115, 7
    %v117 = vsub.s32 0, %v116
    %v118 = vrot.slane %v112, %v117
    %v128 = vunpack.c.l.b16 %v104
    %v129 = vunpack.c.l.b16 %v105
    %v130 = vunpack.c.l.b16 %v106
    %v131 = vunpack.c.l.b16 %v107
    %v132 = vunpack.c.l.b16 %v108
    %v133 = vunpack.c.l.b16 %v109
    %v134 = vunpack.c.l.b16 %v110
    %v135 = vunpack.c.l.b16 %v111
    %v136 = vpack.c.b16 %v129, %v128
    %v137 = vpack.c.b16 %v131, %v130
    %v138 = vpack.c.b16 %v133, %v132
    %v139 = vpack.c.b16 %v135, %v134
    %vm144 = vcmask 523264
    %v146 = vsel %vm144, %v113, 0
    %148 = vmatprep.subr.bf16.mxu0 0
    %149 = vmatpush1.bf16.msra.mxu0 %v136
    %150 = vmatprep.subr.bf16.mxu0 0
    %151 = vmatpush1.bf16.msra.mxu0 %v137
    %152 = vmatprep.subr.bf16.mxu0 0
    %153 = vmatpush1.bf16.msra.mxu0 %v138
    %154 = vmatprep.subr.bf16.mxu0 0
    %155 = vmatpush1.bf16.msra.mxu0 %v139
    %156 = vmatprep.subr.bf16.mxu0 0
    %157 = vmatpush1.bf16.msra.mxu0 0
    %158 = vmatprep.subr.bf16.mxu0 0
    %159 = vmatpush1.bf16.msra.mxu0 0
    %160 = vmatprep.subr.bf16.mxu0 0
    %161 = vmatpush1.bf16.msra.mxu0 0
    %162 = vmatprep.subr.bf16.mxu0 0
    %163 = vmatpush1.bf16.msra.mxu0 0
    %164 = vmatprep.subr.bf16.mxu0 0
    %165 = vmatpush1.bf16.msra.mxu0 0
    %166 = vmatprep.subr.bf16.mxu0 0
    %167 = vmatpush1.bf16.msra.mxu0 0
    %168 = vmatprep.subr.bf16.mxu0 0
    %169 = vmatpush1.bf16.msra.mxu0 0
    %170 = vmatprep.subr.bf16.mxu0 0
    %171 = vmatpush1.bf16.msra.mxu0 0
    %172 = vmatprep.subr.bf16.mxu0 0
    %173 = vmatpush1.bf16.msra.mxu0 0
    %174 = vmatprep.subr.bf16.mxu0 0
    %175 = vmatpush1.bf16.msra.mxu0 0
    %176 = vmatprep.subr.bf16.mxu0 0
    %177 = vmatpush1.bf16.msra.mxu0 0
    %178 = vmatprep.subr.bf16.mxu0 0
    %179 = vmatpush1.bf16.msra.mxu0 0
    %180 = vmatprep.mubr.bf16.mxu0 0
    %181 = vmatmul.mubr.bf16.gmra.mrb[0].mxu0 %v146
    %v182 = vpop.f32.mrb[0].mxu0
    %v183 = vadd.f32 %v118, %v182
    %v184 = vpop.f32.mrb[0].mxu0
    %v185 = vpop.f32.mrb[0].mxu0
    %v186 = vadd.f32 %v118, %v185
    %v187 = vpop.f32.mrb[0].mxu0
    %188 = vdwg.mxu0
    %v189 = vtanh.pop %v183
    %v190 = vtanh.pop %v186
    %v191 = vld [vmem:[#allocation7] sm:$0xf]
    %v192 = vld [vmem:[#allocation7 + $0x4] sm:$0xf]
    %v193 = vld [vmem:[#allocation7 + $0x8] sm:$0xf]
    %v194 = vld [vmem:[#allocation7 + $0xc] sm:$0xf]
    %v195 = vld [vmem:[#allocation7 + $0x10] sm:$0xf]
    %v196 = vld [vmem:[#allocation7 + $0x14] sm:$0xf]
    %v197 = vld [vmem:[#allocation7 + $0x18] sm:$0xf]
    %v198 = vld [vmem:[#allocation7 + $0x1c] sm:$0xf]
    %v199 = vld [vmem:[#allocation7 + $0x20] sm:$0xf]
    %v200 = vld [vmem:[#allocation7 + $0x24] sm:$0xf]
    %v201 = vld [vmem:[#allocation7 + $0x28] sm:$0xf]
    %v202 = vld [vmem:[#allocation7 + $0x2c] sm:$0xf]
    %v203 = vld [vmem:[#allocation7 + $0x30] sm:$0xf]
    %v204 = vld [vmem:[#allocation7 + $0x34] sm:$0xf]
    %v205 = vld [vmem:[#allocation7 + $0x38] sm:$0xf]
    %v206 = vld [vmem:[#allocation7 + $0x3c] sm:$0xf]
    %v207 = vld [vmem:[%s4] sm:$0x1]
    %v208 = vpack.c.bf16 %v190, %v189
    %v210 = vlaneseq
    %v211 = vshrl.u32 %v210, 7
    %v212 = vsub.s32 0, %v211
    %v213 = vrot.slane %v207, %v212
    %v231 = vunpack.c.l.b16 %v191
    %v232 = vunpack.c.l.b16 %v192
    %v233 = vunpack.c.l.b16 %v193
    %v234 = vunpack.c.l.b16 %v194
    %v235 = vunpack.c.l.b16 %v195
    %v236 = vunpack.c.l.b16 %v196
    %v237 = vunpack.c.l.b16 %v197
    %v238 = vunpack.c.l.b16 %v198
    %v239 = vunpack.c.l.b16 %v199
    %v240 = vunpack.c.l.b16 %v200
    %v241 = vunpack.c.l.b16 %v201
    %v242 = vunpack.c.l.b16 %v202
    %v243 = vunpack.c.l.b16 %v203
    %v244 = vunpack.c.l.b16 %v204
    %v245 = vunpack.c.l.b16 %v205
    %v246 = vunpack.c.l.b16 %v206
    %v247 = vpack.c.b16 %v232, %v231
    %v248 = vpack.c.b16 %v234, %v233
    %v249 = vpack.c.b16 %v236, %v235
    %v250 = vpack.c.b16 %v238, %v237
    %v251 = vpack.c.b16 %v240, %v239
    %v252 = vpack.c.b16 %v242, %v241
    %v253 = vpack.c.b16 %v244, %v243
    %v254 = vpack.c.b16 %v246, %v245
    %263 = vmatprep.subr.bf16.mxu0 0
    %264 = vmatpush1.bf16.msra.mxu0 %v247
    %265 = vmatprep.subr.bf16.mxu0 0
    %266 = vmatpush1.bf16.msra.mxu0 %v248
    %267 = vmatprep.subr.bf16.mxu0 0
    %268 = vmatpush1.bf16.msra.mxu0 %v249
    %269 = vmatprep.subr.bf16.mxu0 0
    %270 = vmatpush1.bf16.msra.mxu0 %v250
    %271 = vmatprep.subr.bf16.mxu0 0
    %272 = vmatpush1.bf16.msra.mxu0 %v251
    %273 = vmatprep.subr.bf16.mxu0 0
    %274 = vmatpush1.bf16.msra.mxu0 %v252
    %275 = vmatprep.subr.bf16.mxu0 0
    %276 = vmatpush1.bf16.msra.mxu0 %v253
    %277 = vmatprep.subr.bf16.mxu0 0
    %278 = vmatpush1.bf16.msra.mxu0 %v254
    %279 = vmatprep.subr.bf16.mxu0 0
    %280 = vmatpush1.bf16.msra.mxu0 0
    %281 = vmatprep.subr.bf16.mxu0 0
    %282 = vmatpush1.bf16.msra.mxu0 0
    %283 = vmatprep.subr.bf16.mxu0 0
    %284 = vmatpush1.bf16.msra.mxu0 0
    %285 = vmatprep.subr.bf16.mxu0 0
    %286 = vmatpush1.bf16.msra.mxu0 0
    %287 = vmatprep.subr.bf16.mxu0 0
    %288 = vmatpush1.bf16.msra.mxu0 0
    %289 = vmatprep.subr.bf16.mxu0 0
    %290 = vmatpush1.bf16.msra.mxu0 0
    %291 = vmatprep.subr.bf16.mxu0 0
    %292 = vmatpush1.bf16.msra.mxu0 0
    %293 = vmatprep.subr.bf16.mxu0 0
    %294 = vmatpush1.bf16.msra.mxu0 0
    %295 = vmatprep.mubr.bf16.mxu0 0
    %296 = vmatmul.mubr.bf16.gmra.mrb[0].mxu0 %v208
    %v297 = vpop.f32.mrb[0].mxu0
    %v298 = vadd.f32 %v213, %v297
    %v299 = vpop.f32.mrb[0].mxu0
    %v300 = vpop.f32.mrb[0].mxu0
    %v301 = vadd.f32 %v213, %v300
    %v302 = vpop.f32.mrb[0].mxu0
    %303 = vdwg.mxu0
    %v304 = vtanh.pop %v298
    %v305 = vtanh.pop %v301
    %v306 = vld [vmem:[#allocation8] sm:$0xf]
    %v307 = vld [vmem:[#allocation8 + $0x4] sm:$0xf]
    %v308 = vld [vmem:[#allocation8 + $0x8] sm:$0xf]
    %v309 = vld [vmem:[#allocation8 + $0xc] sm:$0xf]
    %v310 = vld [vmem:[#allocation8 + $0x10] sm:$0xf]
    %v311 = vld [vmem:[#allocation8 + $0x14] sm:$0xf]
    %v312 = vld [vmem:[#allocation8 + $0x18] sm:$0xf]
    %v313 = vld [vmem:[#allocation8 + $0x1c] sm:$0xf]
    %v314 = vld [vmem:[#allocation8 + $0x20] sm:$0xf]
    %v315 = vld [vmem:[#allocation8 + $0x24] sm:$0xf]
    %v316 = vld [vmem:[#allocation8 + $0x28] sm:$0xf]
    %v317 = vld [vmem:[#allocation8 + $0x2c] sm:$0xf]
    %v318 = vld [vmem:[#allocation8 + $0x30] sm:$0xf]
    %v319 = vld [vmem:[#allocation8 + $0x34] sm:$0xf]
    %v320 = vld [vmem:[#allocation8 + $0x38] sm:$0xf]
    %v321 = vld [vmem:[#allocation8 + $0x3c] sm:$0xf]
    %v322 = vld [vmem:[%s6] sm:$0x1]
    %v323 = vpack.c.bf16 %v305, %v304
    %v325 = vlaneseq
    %v326 = vshrl.u32 %v325, 7
    %v327 = vsub.s32 0, %v326
    %v328 = vrot.slane %v322, %v327
    %v346 = vunpack.c.l.b16 %v306
    %v347 = vunpack.c.l.b16 %v307
    %v348 = vunpack.c.l.b16 %v308
    %v349 = vunpack.c.l.b16 %v309
    %v350 = vunpack.c.l.b16 %v310
    %v351 = vunpack.c.l.b16 %v311
    %v352 = vunpack.c.l.b16 %v312
    %v353 = vunpack.c.l.b16 %v313
    %v354 = vunpack.c.l.b16 %v314
    %v355 = vunpack.c.l.b16 %v315
    %v356 = vunpack.c.l.b16 %v316
    %v357 = vunpack.c.l.b16 %v317
    %v358 = vunpack.c.l.b16 %v318
    %v359 = vunpack.c.l.b16 %v319
    %v360 = vunpack.c.l.b16 %v320
    %v361 = vunpack.c.l.b16 %v321
    %v362 = vpack.c.b16 %v347, %v346
    %v363 = vpack.c.b16 %v349, %v348
    %v364 = vpack.c.b16 %v351, %v350
    %v365 = vpack.c.b16 %v353, %v352
    %v366 = vpack.c.b16 %v355, %v354
    %v367 = vpack.c.b16 %v357, %v356
    %v368 = vpack.c.b16 %v359, %v358
    %v369 = vpack.c.b16 %v361, %v360
    %378 = vmatprep.subr.bf16.mxu0 0
    %379 = vmatpush1.bf16.msra.mxu0 %v362
    %380 = vmatprep.subr.bf16.mxu0 0
    %381 = vmatpush1.bf16.msra.mxu0 %v363
    %382 = vmatprep.subr.bf16.mxu0 0
    %383 = vmatpush1.bf16.msra.mxu0 %v364
    %384 = vmatprep.subr.bf16.mxu0 0
    %385 = vmatpush1.bf16.msra.mxu0 %v365
    %386 = vmatprep.subr.bf16.mxu0 0
    %387 = vmatpush1.bf16.msra.mxu0 %v366
    %388 = vmatprep.subr.bf16.mxu0 0
    %389 = vmatpush1.bf16.msra.mxu0 %v367
    %390 = vmatprep.subr.bf16.mxu0 0
    %391 = vmatpush1.bf16.msra.mxu0 %v368
    %392 = vmatprep.subr.bf16.mxu0 0
    %393 = vmatpush1.bf16.msra.mxu0 %v369
    %394 = vmatprep.subr.bf16.mxu0 0
    %395 = vmatpush1.bf16.msra.mxu0 0
    %396 = vmatprep.subr.bf16.mxu0 0
    %397 = vmatpush1.bf16.msra.mxu0 0
    %398 = vmatprep.subr.bf16.mxu0 0
    %399 = vmatpush1.bf16.msra.mxu0 0
    %400 = vmatprep.subr.bf16.mxu0 0
    %401 = vmatpush1.bf16.msra.mxu0 0
    %402 = vmatprep.subr.bf16.mxu0 0
    %403 = vmatpush1.bf16.msra.mxu0 0
    %404 = vmatprep.subr.bf16.mxu0 0
    %405 = vmatpush1.bf16.msra.mxu0 0
    %406 = vmatprep.subr.bf16.mxu0 0
    %407 = vmatpush1.bf16.msra.mxu0 0
    %408 = vmatprep.subr.bf16.mxu0 0
    %409 = vmatpush1.bf16.msra.mxu0 0
    %410 = vmatprep.mubr.bf16.mxu0 0
    %411 = vmatmul.mubr.bf16.gmra.mrb[0].mxu0 %v323
    %v412 = vpop.f32.mrb[0].mxu0
    %v413 = vadd.f32 %v328, %v412
    %v414 = vpop.f32.mrb[0].mxu0
    %v415 = vpop.f32.mrb[0].mxu0
    %v416 = vadd.f32 %v328, %v415
    %v417 = vpop.f32.mrb[0].mxu0
    %418 = vdwg.mxu0
    %v419 = vtanh.pop %v413
    %v420 = vtanh.pop %v416
    %v421 = vld [vmem:[#allocation10] sm:$0xf]
    %v422 = vld [vmem:[#allocation10 + $0x4] sm:$0xf]
    %v423 = vld [vmem:[#allocation10 + $0x8] sm:$0xf]
    %v424 = vld [vmem:[#allocation10 + $0xc] sm:$0xf]
    %v425 = vld [vmem:[#allocation10 + $0x10] sm:$0xf]
    %v426 = vld [vmem:[#allocation10 + $0x14] sm:$0xf]
    %v427 = vld [vmem:[#allocation10 + $0x18] sm:$0xf]
    %v428 = vld [vmem:[#allocation10 + $0x1c] sm:$0xf]
    %v429 = vld [vmem:[#allocation10 + $0x20] sm:$0xf]
    %v430 = vld [vmem:[#allocation10 + $0x24] sm:$0xf]
    %v431 = vld [vmem:[#allocation10 + $0x28] sm:$0xf]
    %v432 = vld [vmem:[#allocation10 + $0x2c] sm:$0xf]
    %v433 = vld [vmem:[#allocation10 + $0x30] sm:$0xf]
    %v434 = vld [vmem:[#allocation10 + $0x34] sm:$0xf]
    %v435 = vld [vmem:[#allocation10 + $0x38] sm:$0xf]
    %v436 = vld [vmem:[#allocation10 + $0x3c] sm:$0xf]
    %v437 = vld [vmem:[%s8] sm:$0x1]
    %v438 = vpack.c.bf16 %v420, %v419
    %v440 = vlaneseq
    %v441 = vshrl.u32 %v440, 7
    %v442 = vsub.s32 0, %v441
    %v443 = vrot.slane %v437, %v442
    %v461 = vunpack.c.l.b16 %v421
    %v462 = vunpack.c.l.b16 %v422
    %v463 = vunpack.c.l.b16 %v423
    %v464 = vunpack.c.l.b16 %v424
    %v465 = vunpack.c.l.b16 %v425
    %v466 = vunpack.c.l.b16 %v426
    %v467 = vunpack.c.l.b16 %v427
    %v468 = vunpack.c.l.b16 %v428
    %v469 = vunpack.c.l.b16 %v429
    %v470 = vunpack.c.l.b16 %v430
    %v471 = vunpack.c.l.b16 %v431
    %v472 = vunpack.c.l.b16 %v432
    %v473 = vunpack.c.l.b16 %v433
    %v474 = vunpack.c.l.b16 %v434
    %v475 = vunpack.c.l.b16 %v435
    %v476 = vunpack.c.l.b16 %v436
    %v477 = vpack.c.b16 %v462, %v461
    %v478 = vpack.c.b16 %v464, %v463
    %v479 = vpack.c.b16 %v466, %v465
    %v480 = vpack.c.b16 %v468, %v467
    %v481 = vpack.c.b16 %v470, %v469
    %v482 = vpack.c.b16 %v472, %v471
    %v483 = vpack.c.b16 %v474, %v473
    %v484 = vpack.c.b16 %v476, %v475
    %493 = vmatprep.subr.bf16.mxu0 0
    %494 = vmatpush1.bf16.msra.mxu0 %v477
    %495 = vmatprep.subr.bf16.mxu0 0
    %496 = vmatpush1.bf16.msra.mxu0 %v478
    %497 = vmatprep.subr.bf16.mxu0 0
    %498 = vmatpush1.bf16.msra.mxu0 %v479
    %499 = vmatprep.subr.bf16.mxu0 0
    %500 = vmatpush1.bf16.msra.mxu0 %v480
    %501 = vmatprep.subr.bf16.mxu0 0
    %502 = vmatpush1.bf16.msra.mxu0 %v481
    %503 = vmatprep.subr.bf16.mxu0 0
    %504 = vmatpush1.bf16.msra.mxu0 %v482
    %505 = vmatprep.subr.bf16.mxu0 0
    %506 = vmatpush1.bf16.msra.mxu0 %v483
    %507 = vmatprep.subr.bf16.mxu0 0
    %508 = vmatpush1.bf16.msra.mxu0 %v484
    %509 = vmatprep.subr.bf16.mxu0 0
    %510 = vmatpush1.bf16.msra.mxu0 0
    %511 = vmatprep.subr.bf16.mxu0 0
    %512 = vmatpush1.bf16.msra.mxu0 0
    %513 = vmatprep.subr.bf16.mxu0 0
    %514 = vmatpush1.bf16.msra.mxu0 0
    %515 = vmatprep.subr.bf16.mxu0 0
    %516 = vmatpush1.bf16.msra.mxu0 0
    %517 = vmatprep.subr.bf16.mxu0 0
    %518 = vmatpush1.bf16.msra.mxu0 0
    %519 = vmatprep.subr.bf16.mxu0 0
    %520 = vmatpush1.bf16.msra.mxu0 0
    %521 = vmatprep.subr.bf16.mxu0 0
    %522 = vmatpush1.bf16.msra.mxu0 0
    %523 = vmatprep.subr.bf16.mxu0 0
    %524 = vmatpush1.bf16.msra.mxu0 0
    %525 = vmatprep.mubr.bf16.mxu0 0
    %526 = vmatmul.mubr.bf16.gmra.mrb[0].mxu0 %v438
    %v527 = vpop.f32.mrb[0].mxu0
    %v528 = vadd.f32 %v443, %v527
    %v529 = vpop.f32.mrb[0].mxu0
    %v530 = vpop.f32.mrb[0].mxu0
    %v531 = vadd.f32 %v443, %v530
    %v532 = vpop.f32.mrb[0].mxu0
    %533 = vdwg.mxu0
    %v534 = vsub.f32 0.0, %v528
    %v535 = vsub.f32 0.0, %v531
    %v536 = vmul.f32 %v534, 1.442695
    %v537 = vpow.pop %v536
    %v538 = vmul.f32 %v535, 1.442695
    %v539 = vpow.pop %v538
    %v540 = vadd.f32 %v537, 1.0
    %v541 = vadd.f32 %v539, 1.0
    %v542 = vrcp.pop %v540
    %v543 = vrcp.pop %v541
    %v544 = vlaneseq
    %v545 = vand.u32 %v544, 127
    %vm546 = vcmp.lt.s32.totalorder %v545, 64
    %v547 = vsel %vm546, %v542, 0.0
    %v548 = vsel %vm546, %v543, 0.0
    %549 = vst [vmem:[#allocation11] sm:$0xff] %v547
    %550 = vst [vmem:[#allocation11 + $0x8] sm:$0xff] %v548
    // Predicated region
    $region58: #{tpu_custom_call.1} parent=1 // pred_check
      _
    $region59: #{tpu_custom_call.1} parent=1 // pred_check_branch
      %552 = sbr.rel (0) target = $region61
    $region60: #{tpu_custom_call.1} parent=1 // pred_region
      %s554 = ssub.s32 256, 256
      %555 = vsyncadd [#allocation4], %s554
      %s556 = sshll.u32 [#allocation11], 4
      %s557 = int_to_ptr.vmem [resolvable:$true] %s556
      %562 = dma.vmem_to_hbm [thread:$0]  %s557, 256, %s9, [#allocation4], 128, 128, 8
    $region61: #{tpu_custom_call.1} parent=1 // pred_fallthru
      _
    // Predicated region
    $region62: #{tpu_custom_call.1} parent=1 // pred_check
      _
    $region63: #{tpu_custom_call.1} parent=1 // pred_check_branch
      %564 = sbr.rel (0) target = $region65
    $region64: #{tpu_custom_call.1} parent=1 // pred_region
      %565 = dma.done [#allocation4], 256
    $region65: #{tpu_custom_call.1} parent=1 // pred_fallthru
      _
    %566 = vsyncpa [#allocation3], 1
    %567 = vsyncpa [#allocation6], 1
    %568 = vsyncpa [#allocation9], 1
    %569 = vsyncpa [#allocation4], 1

// kernel: tpu_custom_call.1
$region0: #{tpu_custom_call.1}
  #allocation0 [shape = 'u32[]', space=smem, size = 0x4, offset = 0x4, fixed_abs, tag = 'smem constant byte address 0x4 - core index']
  #allocation1 [shape = 'u32[144,128]{1,0:T(1,128)}', space=vmem, size = 0x12000, scoped, tag = 'internal scratch']
  %s0 = inlined_call_operand.hbm [shape: f32[16,64], index: 0, kind: input, shape index: {}]
  %s1 = inlined_call_operand.hbm [shape: bf16[64,128], index: 1, kind: input, shape index: {}]
  %s2 = inlined_call_operand.vmem [shape: f32[1,128], index: 2, kind: input, shape index: {}]
  %s3 = inlined_call_operand.hbm [shape: bf16[128,128], index: 3, kind: input, shape index: {}]
  %s4 = inlined_call_operand.vmem [shape: f32[1,128], index: 4, kind: input, shape index: {}]
  %s5 = inlined_call_operand.hbm [shape: bf16[128,128], index: 5, kind: input, shape index: {}]
  %s6 = inlined_call_operand.vmem [shape: f32[1,128], index: 6, kind: input, shape index: {}]
  %s7 = inlined_call_operand.hbm [shape: bf16[128,128], index: 7, kind: input, shape index: {}]
  %s8 = inlined_call_operand.vmem [shape: f32[1,128], index: 8, kind: input, shape index: {}]
  %s9 = inlined_call_operand.hbm [shape: f32[16,128], index: 9, kind: output, shape index: {}]
  %s10 = sld [smem:[#allocation0]]
  $region66: #{tpu_custom_call.1} parent=0
    _
  %s12 = ssub.s32 1, %s10
  %s13 = scalar_select 0, %s12, %s10
  $region1: #{tpu_custom_call.1} parent=0
    #allocation2 [shape = 'u8[8192]{0}', space=vmem, size = 0x2000, scoped, tag = 'input window, operand 0, single buffered']
    #allocation3 [shape = 's32[1]{0}', space=sflag, size = 0x4, scoped, tag = 'scoped memory for tpu_custom_call.1']
    #allocation4 [shape = 's32[1]{0}', space=sflag, size = 0x4, scoped, tag = 'scoped memory for tpu_custom_call.1']
    #allocation5 [shape = 'u8[16384]{0}', space=vmem, size = 0x4000, scoped, tag = 'input window, operand 1, single buffered']
    #allocation6 [shape = 's32[1]{0}', space=sflag, size = 0x4, scoped, tag = 'scoped memory for tpu_custom_call.1']
    #allocation7 [shape = 'u8[32768]{0}', space=vmem, size = 0x8000, scoped, tag = 'input window, operand 3, single buffered']
    #allocation8 [shape = 'u8[32768]{0}', space=vmem, size = 0x8000, scoped, tag = 'input window, operand 5, single buffered']
    #allocation9 [shape = 's32[1]{0}', space=sflag, size = 0x4, scoped, tag = 'scoped memory for tpu_custom_call.1']
    #allocation10 [shape = 'u8[32768]{0}', space=vmem, size = 0x8000, scoped, tag = 'input window, operand 7, single buffered']
    #allocation11 [shape = 'u8[8192]{0}', space=vmem, size = 0x2000, scoped, tag = 'output window, operand 0, single buffered']
    %14 = vsyncpa [#allocation3], 0
    %15 = vsyncpa [#allocation6], 0
    %16 = vsyncpa [#allocation9], 0
    %17 = vsyncpa [#allocation4], 0
    // Predicated region
    $region2: #{tpu_custom_call.1} parent=1 // pred_check
      _
    $region3: #{tpu_custom_call.1} parent=1 // pred_check_branch
      %19 = sbr.rel (0) target = $region5
    $region4: #{tpu_custom_call.1} parent=1 // pred_region
      %s21 = ssub.s32 256, 256
      %22 = vsyncadd [#allocation3], %s21
      %s23 = sshll.u32 [#allocation2], 4
      %s24 = int_to_ptr.vmem [resolvable:$true] %s23
      %29 = dma.hbm_to_vmem [thread:$0]  %s0, 256, %s24, [#allocation3], 128, 128, 8
    $region5: #{tpu_custom_call.1} parent=1 // pred_fallthru
      _
    // Predicated region
    $region6: #{tpu_custom_call.1} parent=1 // pred_check
      _
    $region7: #{tpu_custom_call.1} parent=1 // pred_check_branch
      %31 = sbr.rel (0) target = $region9
    $region8: #{tpu_custom_call.1} parent=1 // pred_region
      %s33 = ssub.s32 512, 512
      %34 = vsyncadd [#allocation6], %s33
      %s35 = sshll.u32 [#allocation5], 4
      %s36 = int_to_ptr.vmem [resolvable:$true] %s35
      %41 = dma.hbm_to_vmem [thread:$0]  %s1, 512, %s36, [#allocation6], 64, 64, 4
    $region9: #{tpu_custom_call.1} parent=1 // pred_fallthru
      _
    // Predicated region
    $region10: #{tpu_custom_call.1} parent=1 // pred_check
      _
    $region11: #{tpu_custom_call.1} parent=1 // pred_check_branch
      %43 = sbr.rel (0) target = $region13
    $region12: #{tpu_custom_call.1} parent=1 // pred_region
      _
    $region13: #{tpu_custom_call.1} parent=1 // pred_fallthru
      _
    // Predicated region
    $region14: #{tpu_custom_call.1} parent=1 // pred_check
      _
    $region15: #{tpu_custom_call.1} parent=1 // pred_check_branch
      %45 = sbr.rel (0) target = $region17
    $region16: #{tpu_custom_call.1} parent=1 // pred_region
      %s47 = ssub.s32 1024, 1024
      %48 = vsyncadd [#allocation6], %s47
      %s49 = sshll.u32 [#allocation7], 4
      %s50 = int_to_ptr.vmem [resolvable:$true] %s49
      %55 = dma.hbm_to_vmem [thread:$0]  %s3, 1024, %s50, [#allocation6], 64, 64, 4
    $region17: #{tpu_custom_call.1} parent=1 // pred_fallthru
      _
    // Predicated region
    $region18: #{tpu_custom_call.1} parent=1 // pred_check
      _
    $region19: #{tpu_custom_call.1} parent=1 // pred_check_branch
      %57 = sbr.rel (0) target = $region21
    $region20: #{tpu_custom_call.1} parent=1 // pred_region
      _
    $region21: #{tpu_custom_call.1} parent=1 // pred_fallthru
      _
    // Predicated region
    $region22: #{tpu_custom_call.1} parent=1 // pred_check
      _
    $region23: #{tpu_custom_call.1} parent=1 // pred_check_branch
      %59 = sbr.rel (0) target = $region25
    $region24: #{tpu_custom_call.1} parent=1 // pred_region
      %s61 = ssub.s32 1024, 1024
      %62 = vsyncadd [#allocation9], %s61
      %s63 = sshll.u32 [#allocation8], 4
      %s64 = int_to_ptr.vmem [resolvable:$true] %s63
      %69 = dma.hbm_to_vmem [thread:$0]  %s5, 1024, %s64, [#allocation9], 64, 64, 4
    $region25: #{tpu_custom_call.1} parent=1 // pred_fallthru
      _
    // Predicated region
    $region26: #{tpu_custom_call.1} parent=1 // pred_check
      _
    $region27: #{tpu_custom_call.1} parent=1 // pred_check_branch
      %71 = sbr.rel (0) target = $region29
    $region28: #{tpu_custom_call.1} parent=1 // pred_region
      _
    $region29: #{tpu_custom_call.1} parent=1 // pred_fallthru
      _
    // Predicated region
    $region30: #{tpu_custom_call.1} parent=1 // pred_check
      _
    $region31: #{tpu_custom_call.1} parent=1 // pred_check_branch
      %73 = sbr.rel (0) target = $region33
    $region32: #{tpu_custom_call.1} parent=1 // pred_region
      %s75 = ssub.s32 1024, 1024
      %76 = vsyncadd [#allocation9], %s75
      %s77 = sshll.u32 [#allocation10], 4
      %s78 = int_to_ptr.vmem [resolvable:$true] %s77
      %83 = dma.hbm_to_vmem [thread:$0]  %s7, 1024, %s78, [#allocation9], 64, 64, 4
    $region33: #{tpu_custom_call.1} parent=1 // pred_fallthru
      _
    // Predicated region
    $region34: #{tpu_custom_call.1} parent=1 // pred_check
      _
    $region35: #{tpu_custom_call.1} parent=1 // pred_check_branch
      %85 = sbr.rel (0) target = $region37
    $region36: #{tpu_custom_call.1} parent=1 // pred_region
      _
    $region37: #{tpu_custom_call.1} parent=1 // pred_fallthru
      _
    // Predicated region
    $region38: #{tpu_custom_call.1} parent=1 // pred_check
      _
    $region39: #{tpu_custom_call.1} parent=1 // pred_check_branch
      %87 = sbr.rel (0) target = $region41
    $region40: #{tpu_custom_call.1} parent=1 // pred_region
      %88 = dma.done [#allocation3], 256
    $region41: #{tpu_custom_call.1} parent=1 // pred_fallthru
      _
    // Predicated region
    $region42: #{tpu_custom_call.1} parent=1 // pred_check
      _
    $region43: #{tpu_custom_call.1} parent=1 // pred_check_branch
      %90 = sbr.rel (0) target = $region45
    $region44: #{tpu_custom_call.1} parent=1 // pred_region
      %91 = dma.done [#allocation6], 512
    $region45: #{tpu_custom_call.1} parent=1 // pred_fallthru
      _
    // Predicated region
    $region46: #{tpu_custom_call.1} parent=1 // pred_check
      _
    $region47: #{tpu_custom_call.1} parent=1 // pred_check_branch
      %93 = sbr.rel (0) target = $region49
    $region48: #{tpu_custom_call.1} parent=1 // pred_region
      %94 = dma.done [#allocation6], 1024
    $region49: #{tpu_custom_call.1} parent=1 // pred_fallthru
      _
    // Predicated region
    $region50: #{tpu_custom_call.1} parent=1 // pred_check
      _
    $region51: #{tpu_custom_call.1} parent=1 // pred_check_branch
      %96 = sbr.rel (0) target = $region53
    $region52: #{tpu_custom_call.1} parent=1 // pred_region
      %97 = dma.done [#allocation9], 1024
    $region53: #{tpu_custom_call.1} parent=1 // pred_fallthru
      _
    // Predicated region
    $region54: #{tpu_custom_call.1} parent=1 // pred_check
      _
    $region55: #{tpu_custom_call.1} parent=1 // pred_check_branch
      %99 = sbr.rel (0) target = $region57
    $region56: #{tpu_custom_call.1} parent=1 // pred_region
      %100 = dma.done [#allocation9], 1024
    $region57: #{tpu_custom_call.1} parent=1 // pred_fallthru
      _
    %v102 = vld [vmem:[#allocation2] sm:$0xff]
    %v103 = vld [vmem:[#allocation2 + $0x8] sm:$0xff]
    %v104 = vld [vmem:[#allocation5] sm:$0xf]
    %v105 = vld [vmem:[#allocation5 + $0x4] sm:$0xf]
    %v106 = vld [vmem:[#allocation5 + $0x8] sm:$0xf]
    %v107 = vld [vmem:[#allocation5 + $0xc] sm:$0xf]
    %v108 = vld [vmem:[#allocation5 + $0x10] sm:$0xf]
    %v109 = vld [vmem:[#allocation5 + $0x14] sm:$0xf]
    %v110 = vld [vmem:[#allocation5 + $0x18] sm:$0xf]
    %v111 = vld [vmem:[#allocation5 + $0x1c] sm:$0xf]
    %v112 = vld [vmem:[%s2] sm:$0x1]
    %v113 = vpack.c.bf16 %v103, %v102
    %v115 = vlaneseq
    %v116 = vshrl.u32 %v115, 7
    %v117 = vsub.s32 0, %v116
    %v118 = vrot.slane %v112, %v117
    %v128 = vunpack.c.l.b16 %v104
    %v129 = vunpack.c.l.b16 %v105
    %v130 = vunpack.c.l.b16 %v106
    %v131 = vunpack.c.l.b16 %v107
    %v132 = vunpack.c.l.b16 %v108
    %v133 = vunpack.c.l.b16 %v109
    %v134 = vunpack.c.l.b16 %v110
    %v135 = vunpack.c.l.b16 %v111
    %v136 = vpack.c.b16 %v129, %v128
    %v137 = vpack.c.b16 %v131, %v130
    %v138 = vpack.c.b16 %v133, %v132
    %v139 = vpack.c.b16 %v135, %v134
    %vm144 = vcmask 523264
    %v146 = vsel %vm144, %v113, 0
    %148 = vmatprep.subr.bf16.mxu0 0
    %149 = vmatpush1.bf16.msra.mxu0 %v136
    %150 = vmatprep.subr.bf16.mxu0 0
    %151 = vmatpush1.bf16.msra.mxu0 %v137
    %152 = vmatprep.subr.bf16.mxu0 0
    %153 = vmatpush1.bf16.msra.mxu0 %v138
    %154 = vmatprep.subr.bf16.mxu0 0
    %155 = vmatpush1.bf16.msra.mxu0 %v139
    %156 = vmatprep.subr.bf16.mxu0 0
    %157 = vmatpush1.bf16.msra.mxu0 0
    %158 = vmatprep.subr.bf16.mxu0 0
    %159 = vmatpush1.bf16.msra.mxu0 0
    %160 = vmatprep.subr.bf16.mxu0 0
    %161 = vmatpush1.bf16.msra.mxu0 0
    %162 = vmatprep.subr.bf16.mxu0 0
    %163 = vmatpush1.bf16.msra.mxu0 0
    %164 = vmatprep.subr.bf16.mxu0 0
    %165 = vmatpush1.bf16.msra.mxu0 0
    %166 = vmatprep.subr.bf16.mxu0 0
    %167 = vmatpush1.bf16.msra.mxu0 0
    %168 = vmatprep.subr.bf16.mxu0 0
    %169 = vmatpush1.bf16.msra.mxu0 0
    %170 = vmatprep.subr.bf16.mxu0 0
    %171 = vmatpush1.bf16.msra.mxu0 0
    %172 = vmatprep.subr.bf16.mxu0 0
    %173 = vmatpush1.bf16.msra.mxu0 0
    %174 = vmatprep.subr.bf16.mxu0 0
    %175 = vmatpush1.bf16.msra.mxu0 0
    %176 = vmatprep.subr.bf16.mxu0 0
    %177 = vmatpush1.bf16.msra.mxu0 0
    %178 = vmatprep.subr.bf16.mxu0 0
    %179 = vmatpush1.bf16.msra.mxu0 0
    %180 = vmatprep.mubr.bf16.mxu0 0
    %181 = vmatmul.mubr.bf16.gmra.mrb[0].mxu0 %v146
    %v182 = vpop.f32.mrb[0].mxu0
    %v183 = vadd.f32 %v118, %v182
    %v184 = vpop.f32.mrb[0].mxu0
    %v185 = vpop.f32.mrb[0].mxu0
    %v186 = vadd.f32 %v118, %v185
    %v187 = vpop.f32.mrb[0].mxu0
    %188 = vdwg.mxu0
    %v189 = vtanh.pop %v183
    %v190 = vtanh.pop %v186
    %v191 = vld [vmem:[#allocation7] sm:$0xf]
    %v192 = vld [vmem:[#allocation7 + $0x4] sm:$0xf]
    %v193 = vld [vmem:[#allocation7 + $0x8] sm:$0xf]
    %v194 = vld [vmem:[#allocation7 + $0xc] sm:$0xf]
    %v195 = vld [vmem:[#allocation7 + $0x10] sm:$0xf]
    %v196 = vld [vmem:[#allocation7 + $0x14] sm:$0xf]
    %v197 = vld [vmem:[#allocation7 + $0x18] sm:$0xf]
    %v198 = vld [vmem:[#allocation7 + $0x1c] sm:$0xf]
    %v199 = vld [vmem:[#allocation7 + $0x20] sm:$0xf]
    %v200 = vld [vmem:[#allocation7 + $0x24] sm:$0xf]
    %v201 = vld [vmem:[#allocation7 + $0x28] sm:$0xf]
    %v202 = vld [vmem:[#allocation7 + $0x2c] sm:$0xf]
    %v203 = vld [vmem:[#allocation7 + $0x30] sm:$0xf]
    %v204 = vld [vmem:[#allocation7 + $0x34] sm:$0xf]
    %v205 = vld [vmem:[#allocation7 + $0x38] sm:$0xf]
    %v206 = vld [vmem:[#allocation7 + $0x3c] sm:$0xf]
    %v207 = vld [vmem:[%s4] sm:$0x1]
    %v208 = vpack.c.bf16 %v190, %v189
    %v210 = vlaneseq
    %v211 = vshrl.u32 %v210, 7
    %v212 = vsub.s32 0, %v211
    %v213 = vrot.slane %v207, %v212
    %v231 = vunpack.c.l.b16 %v191
    %v232 = vunpack.c.l.b16 %v192
    %v233 = vunpack.c.l.b16 %v193
    %v234 = vunpack.c.l.b16 %v194
    %v235 = vunpack.c.l.b16 %v195
    %v236 = vunpack.c.l.b16 %v196
    %v237 = vunpack.c.l.b16 %v197
    %v238 = vunpack.c.l.b16 %v198
    %v239 = vunpack.c.l.b16 %v199
    %v240 = vunpack.c.l.b16 %v200
    %v241 = vunpack.c.l.b16 %v201
    %v242 = vunpack.c.l.b16 %v202
    %v243 = vunpack.c.l.b16 %v203
    %v244 = vunpack.c.l.b16 %v204
    %v245 = vunpack.c.l.b16 %v205
    %v246 = vunpack.c.l.b16 %v206
    %v247 = vpack.c.b16 %v232, %v231
    %v248 = vpack.c.b16 %v234, %v233
    %v249 = vpack.c.b16 %v236, %v235
    %v250 = vpack.c.b16 %v238, %v237
    %v251 = vpack.c.b16 %v240, %v239
    %v252 = vpack.c.b16 %v242, %v241
    %v253 = vpack.c.b16 %v244, %v243
    %v254 = vpack.c.b16 %v246, %v245
    %263 = vmatprep.subr.bf16.mxu0 0
    %264 = vmatpush1.bf16.msra.mxu0 %v247
    %265 = vmatprep.subr.bf16.mxu0 0
    %266 = vmatpush1.bf16.msra.mxu0 %v248
    %267 = vmatprep.subr.bf16.mxu0 0
    %268 = vmatpush1.bf16.msra.mxu0 %v249
    %269 = vmatprep.subr.bf16.mxu0 0
    %270 = vmatpush1.bf16.msra.mxu0 %v250
    %271 = vmatprep.subr.bf16.mxu0 0
    %272 = vmatpush1.bf16.msra.mxu0 %v251
    %273 = vmatprep.subr.bf16.mxu0 0
    %274 = vmatpush1.bf16.msra.mxu0 %v252
    %275 = vmatprep.subr.bf16.mxu0 0
    %276 = vmatpush1.bf16.msra.mxu0 %v253
    %277 = vmatprep.subr.bf16.mxu0 0
    %278 = vmatpush1.bf16.msra.mxu0 %v254
    %279 = vmatprep.subr.bf16.mxu0 0
    %280 = vmatpush1.bf16.msra.mxu0 0
    %281 = vmatprep.subr.bf16.mxu0 0
    %282 = vmatpush1.bf16.msra.mxu0 0
    %283 = vmatprep.subr.bf16.mxu0 0
    %284 = vmatpush1.bf16.msra.mxu0 0
    %285 = vmatprep.subr.bf16.mxu0 0
    %286 = vmatpush1.bf16.msra.mxu0 0
    %287 = vmatprep.subr.bf16.mxu0 0
    %288 = vmatpush1.bf16.msra.mxu0 0
    %289 = vmatprep.subr.bf16.mxu0 0
    %290 = vmatpush1.bf16.msra.mxu0 0
    %291 = vmatprep.subr.bf16.mxu0 0
    %292 = vmatpush1.bf16.msra.mxu0 0
    %293 = vmatprep.subr.bf16.mxu0 0
    %294 = vmatpush1.bf16.msra.mxu0 0
    %295 = vmatprep.mubr.bf16.mxu0 0
    %296 = vmatmul.mubr.bf16.gmra.mrb[0].mxu0 %v208
    %v297 = vpop.f32.mrb[0].mxu0
    %v298 = vadd.f32 %v213, %v297
    %v299 = vpop.f32.mrb[0].mxu0
    %v300 = vpop.f32.mrb[0].mxu0
    %v301 = vadd.f32 %v213, %v300
    %v302 = vpop.f32.mrb[0].mxu0
    %303 = vdwg.mxu0
    %v304 = vtanh.pop %v298
    %v305 = vtanh.pop %v301
    %v306 = vld [vmem:[#allocation8] sm:$0xf]
    %v307 = vld [vmem:[#allocation8 + $0x4] sm:$0xf]
    %v308 = vld [vmem:[#allocation8 + $0x8] sm:$0xf]
    %v309 = vld [vmem:[#allocation8 + $0xc] sm:$0xf]
    %v310 = vld [vmem:[#allocation8 + $0x10] sm:$0xf]
    %v311 = vld [vmem:[#allocation8 + $0x14] sm:$0xf]
    %v312 = vld [vmem:[#allocation8 + $0x18] sm:$0xf]
    %v313 = vld [vmem:[#allocation8 + $0x1c] sm:$0xf]
    %v314 = vld [vmem:[#allocation8 + $0x20] sm:$0xf]
    %v315 = vld [vmem:[#allocation8 + $0x24] sm:$0xf]
    %v316 = vld [vmem:[#allocation8 + $0x28] sm:$0xf]
    %v317 = vld [vmem:[#allocation8 + $0x2c] sm:$0xf]
    %v318 = vld [vmem:[#allocation8 + $0x30] sm:$0xf]
    %v319 = vld [vmem:[#allocation8 + $0x34] sm:$0xf]
    %v320 = vld [vmem:[#allocation8 + $0x38] sm:$0xf]
    %v321 = vld [vmem:[#allocation8 + $0x3c] sm:$0xf]
    %v322 = vld [vmem:[%s6] sm:$0x1]
    %v323 = vpack.c.bf16 %v305, %v304
    %v325 = vlaneseq
    %v326 = vshrl.u32 %v325, 7
    %v327 = vsub.s32 0, %v326
    %v328 = vrot.slane %v322, %v327
    %v346 = vunpack.c.l.b16 %v306
    %v347 = vunpack.c.l.b16 %v307
    %v348 = vunpack.c.l.b16 %v308
    %v349 = vunpack.c.l.b16 %v309
    %v350 = vunpack.c.l.b16 %v310
    %v351 = vunpack.c.l.b16 %v311
    %v352 = vunpack.c.l.b16 %v312
    %v353 = vunpack.c.l.b16 %v313
    %v354 = vunpack.c.l.b16 %v314
    %v355 = vunpack.c.l.b16 %v315
    %v356 = vunpack.c.l.b16 %v316
    %v357 = vunpack.c.l.b16 %v317
    %v358 = vunpack.c.l.b16 %v318
    %v359 = vunpack.c.l.b16 %v319
    %v360 = vunpack.c.l.b16 %v320
    %v361 = vunpack.c.l.b16 %v321
    %v362 = vpack.c.b16 %v347, %v346
    %v363 = vpack.c.b16 %v349, %v348
    %v364 = vpack.c.b16 %v351, %v350
    %v365 = vpack.c.b16 %v353, %v352
    %v366 = vpack.c.b16 %v355, %v354
    %v367 = vpack.c.b16 %v357, %v356
    %v368 = vpack.c.b16 %v359, %v358
    %v369 = vpack.c.b16 %v361, %v360
    %378 = vmatprep.subr.bf16.mxu0 0
    %379 = vmatpush1.bf16.msra.mxu0 %v362
    %380 = vmatprep.subr.bf16.mxu0 0
    %381 = vmatpush1.bf16.msra.mxu0 %v363
    %382 = vmatprep.subr.bf16.mxu0 0
    %383 = vmatpush1.bf16.msra.mxu0 %v364
    %384 = vmatprep.subr.bf16.mxu0 0
    %385 = vmatpush1.bf16.msra.mxu0 %v365
    %386 = vmatprep.subr.bf16.mxu0 0
    %387 = vmatpush1.bf16.msra.mxu0 %v366
    %388 = vmatprep.subr.bf16.mxu0 0
    %389 = vmatpush1.bf16.msra.mxu0 %v367
    %390 = vmatprep.subr.bf16.mxu0 0
    %391 = vmatpush1.bf16.msra.mxu0 %v368
    %392 = vmatprep.subr.bf16.mxu0 0
    %393 = vmatpush1.bf16.msra.mxu0 %v369
    %394 = vmatprep.subr.bf16.mxu0 0
    %395 = vmatpush1.bf16.msra.mxu0 0
    %396 = vmatprep.subr.bf16.mxu0 0
    %397 = vmatpush1.bf16.msra.mxu0 0
    %398 = vmatprep.subr.bf16.mxu0 0
    %399 = vmatpush1.bf16.msra.mxu0 0
    %400 = vmatprep.subr.bf16.mxu0 0
    %401 = vmatpush1.bf16.msra.mxu0 0
    %402 = vmatprep.subr.bf16.mxu0 0
    %403 = vmatpush1.bf16.msra.mxu0 0
    %404 = vmatprep.subr.bf16.mxu0 0
    %405 = vmatpush1.bf16.msra.mxu0 0
    %406 = vmatprep.subr.bf16.mxu0 0
    %407 = vmatpush1.bf16.msra.mxu0 0
    %408 = vmatprep.subr.bf16.mxu0 0
    %409 = vmatpush1.bf16.msra.mxu0 0
    %410 = vmatprep.mubr.bf16.mxu0 0
    %411 = vmatmul.mubr.bf16.gmra.mrb[0].mxu0 %v323
    %v412 = vpop.f32.mrb[0].mxu0
    %v413 = vadd.f32 %v328, %v412
    %v414 = vpop.f32.mrb[0].mxu0
    %v415 = vpop.f32.mrb[0].mxu0
    %v416 = vadd.f32 %v328, %v415
    %v417 = vpop.f32.mrb[0].mxu0
    %418 = vdwg.mxu0
    %v419 = vtanh.pop %v413
    %v420 = vtanh.pop %v416
    %v421 = vld [vmem:[#allocation10] sm:$0xf]
    %v422 = vld [vmem:[#allocation10 + $0x4] sm:$0xf]
    %v423 = vld [vmem:[#allocation10 + $0x8] sm:$0xf]
    %v424 = vld [vmem:[#allocation10 + $0xc] sm:$0xf]
    %v425 = vld [vmem:[#allocation10 + $0x10] sm:$0xf]
    %v426 = vld [vmem:[#allocation10 + $0x14] sm:$0xf]
    %v427 = vld [vmem:[#allocation10 + $0x18] sm:$0xf]
    %v428 = vld [vmem:[#allocation10 + $0x1c] sm:$0xf]
    %v429 = vld [vmem:[#allocation10 + $0x20] sm:$0xf]
    %v430 = vld [vmem:[#allocation10 + $0x24] sm:$0xf]
    %v431 = vld [vmem:[#allocation10 + $0x28] sm:$0xf]
    %v432 = vld [vmem:[#allocation10 + $0x2c] sm:$0xf]
    %v433 = vld [vmem:[#allocation10 + $0x30] sm:$0xf]
    %v434 = vld [vmem:[#allocation10 + $0x34] sm:$0xf]
    %v435 = vld [vmem:[#allocation10 + $0x38] sm:$0xf]
    %v436 = vld [vmem:[#allocation10 + $0x3c] sm:$0xf]
    %v437 = vld [vmem:[%s8] sm:$0x1]
    %v438 = vpack.c.bf16 %v420, %v419
    %v440 = vlaneseq
    %v441 = vshrl.u32 %v440, 7
    %v442 = vsub.s32 0, %v441
    %v443 = vrot.slane %v437, %v442
    %v461 = vunpack.c.l.b16 %v421
    %v462 = vunpack.c.l.b16 %v422
    %v463 = vunpack.c.l.b16 %v423
    %v464 = vunpack.c.l.b16 %v424
    %v465 = vunpack.c.l.b16 %v425
    %v466 = vunpack.c.l.b16 %v426
    %v467 = vunpack.c.l.b16 %v427
    %v468 = vunpack.c.l.b16 %v428
    %v469 = vunpack.c.l.b16 %v429
    %v470 = vunpack.c.l.b16 %v430
    %v471 = vunpack.c.l.b16 %v431
    %v472 = vunpack.c.l.b16 %v432
    %v473 = vunpack.c.l.b16 %v433
    %v474 = vunpack.c.l.b16 %v434
    %v475 = vunpack.c.l.b16 %v435
    %v476 = vunpack.c.l.b16 %v436
    %v477 = vpack.c.b16 %v462, %v461
    %v478 = vpack.c.b16 %v464, %v463
    %v479 = vpack.c.b16 %v466, %v465
    %v480 = vpack.c.b16 %v468, %v467
    %v481 = vpack.c.b16 %v470, %v469
    %v482 = vpack.c.b16 %v472, %v471
    %v483 = vpack.c.b16 %v474, %v473
    %v484 = vpack.c.b16 %v476, %v475
    %493 = vmatprep.subr.bf16.mxu0 0
    %494 = vmatpush1.bf16.msra.mxu0 %v477
    %495 = vmatprep.subr.bf16.mxu0 0
    %496 = vmatpush1.bf16.msra.mxu0 %v478
    %497 = vmatprep.subr.bf16.mxu0 0
    %498 = vmatpush1.bf16.msra.mxu0 %v479
    %499 = vmatprep.subr.bf16.mxu0 0
    %500 = vmatpush1.bf16.msra.mxu0 %v480
    %501 = vmatprep.subr.bf16.mxu0 0
    %502 = vmatpush1.bf16.msra.mxu0 %v481
    %503 = vmatprep.subr.bf16.mxu0 0
    %504 = vmatpush1.bf16.msra.mxu0 %v482
    %505 = vmatprep.subr.bf16.mxu0 0
    %506 = vmatpush1.bf16.msra.mxu0 %v483
    %507 = vmatprep.subr.bf16.mxu0 0
    %508 = vmatpush1.bf16.msra.mxu0 %v484
    %509 = vmatprep.subr.bf16.mxu0 0
    %510 = vmatpush1.bf16.msra.mxu0 0
    %511 = vmatprep.subr.bf16.mxu0 0
    %512 = vmatpush1.bf16.msra.mxu0 0
    %513 = vmatprep.subr.bf16.mxu0 0
    %514 = vmatpush1.bf16.msra.mxu0 0
    %515 = vmatprep.subr.bf16.mxu0 0
    %516 = vmatpush1.bf16.msra.mxu0 0
    %517 = vmatprep.subr.bf16.mxu0 0
    %518 = vmatpush1.bf16.msra.mxu0 0
    %519 = vmatprep.subr.bf16.mxu0 0
    %520 = vmatpush1.bf16.msra.mxu0 0
    %521 = vmatprep.subr.bf16.mxu0 0
    %522 = vmatpush1.bf16.msra.mxu0 0
    %523 = vmatprep.subr.bf16.mxu0 0
    %524 = vmatpush1.bf16.msra.mxu0 0
    %525 = vmatprep.mubr.bf16.mxu0 0
    %526 = vmatmul.mubr.bf16.gmra.mrb[0].mxu0 %v438
    %v527 = vpop.f32.mrb[0].mxu0
    %v528 = vadd.f32 %v443, %v527
    %v529 = vpop.f32.mrb[0].mxu0
    %v530 = vpop.f32.mrb[0].mxu0
    %v531 = vadd.f32 %v443, %v530
    %v532 = vpop.f32.mrb[0].mxu0
    %533 = vdwg.mxu0
    %v534 = vsub.f32 0.0, %v528
    %v535 = vsub.f32 0.0, %v531
    %v536 = vmul.f32 %v534, 1.442695
    %v537 = vpow.pop %v536
    %v538 = vmul.f32 %v535, 1.442695
    %v539 = vpow.pop %v538
    %v540 = vadd.f32 %v537, 1.0
    %v541 = vadd.f32 %v539, 1.0
    %v542 = vrcp.pop %v540
    %v543 = vrcp.pop %v541
    %v544 = vlaneseq
    %v545 = vand.u32 %v544, 127
    %vm546 = vcmp.lt.s32.totalorder %v545, 64
    %v547 = vsel %vm546, %v542, 0.0
    %v548 = vsel %vm546, %v543, 0.0
    %549 = vst [vmem:[#allocation11] sm:$0xff] %v547
    %550 = vst [vmem:[#allocation11 + $0x8] sm:$0xff] %v548
    // Predicated region
    $region58: #{tpu_custom_call.1} parent=1 // pred_check
      _
    $region59: #{tpu_custom_call.1} parent=1 // pred_check_branch
      %552 = sbr.rel (0) target = $region61
    $region60: #{tpu_custom_call.1} parent=1 // pred_region
      %s554 = ssub.s32 256, 256
      %555 = vsyncadd [#allocation4], %s554
      %s556 = sshll.u32 [#allocation11], 4
      %s557 = int_to_ptr.vmem [resolvable:$true] %s556
      %562 = dma.vmem_to_hbm [thread:$0]  %s557, 256, %s9, [#allocation4], 128, 128, 8
    $region61: #{tpu_custom_call.1} parent=1 // pred_fallthru
      _
    // Predicated region
    $region62: #{tpu_custom_call.1} parent=1 // pred_check
      _
    $region63: #{tpu_custom_call.1} parent=1 // pred_check_branch
      %564 = sbr.rel (0) target = $region65
    $region64: #{tpu_custom_call.1} parent=1 // pred_region
      %565 = dma.done [#allocation4], 256
    $region65: #{tpu_custom_call.1} parent=1 // pred_fallthru
      _
    %566 = vsyncpa [#allocation3], 1
    %567 = vsyncpa [#allocation6], 1
    %568 = vsyncpa [#allocation9], 1
    %569 = vsyncpa [#allocation4], 1

</llo_original>
